<compile_context>
chip_gen: v7x
topology: tpu7x:2x2x1
jax: 0.10.0
libtpu: 0.0.40
codegen_flags: <defaults>
</compile_context>

<pallas_src>
import functools

import numpy as np
import jax
import jax.numpy as jnp
from jax.experimental import pallas as pl
from jax.experimental.pallas import tpu as pltpu


# -----------------------------------------------------------------------------
# Fused kernel: leaf apply + all internal levels + classifier, h/c VMEM-resident
# -----------------------------------------------------------------------------
def fused_tree_lstm_kernel(emb_ref, mask_ref, c0_ref,
                           wiou_ref, uiou_ref, biou_ref,
                           uf_ref, ufb_ref, lin_ref, linb_ref,
                           logits_ref,
                           h_scr, c_scr,
                           *, depth, h_size, trees_per_block):
    f32 = jnp.float32
    bf16 = jnp.bfloat16
    TB = trees_per_block
    H = h_size

    # --- weights: loaded once per grid step, VMEM-resident, bf16 for the MXU ---
    w_iou = wiou_ref[...]                     # (x, 3H)  bf16
    u_iou_l = uiou_ref[:H, :]                 # (H, 3H)  bf16  (left-child rows of U_iou^T)
    u_iou_r = uiou_ref[H:, :]                 # (H, 3H)  bf16
    u_f_l = uf_ref[:H, :]                     # (H, 2H)  bf16
    u_f_r = uf_ref[H:, :]                     # (H, 2H)  bf16
    lin_w = lin_ref[...]                      # (H, C)   bf16
    # --- biases (f32), hoisted once ---
    b_iou = biou_ref[...]                     # (1, 3H)
    u_f_b = ufb_ref[...]                      # (1, 2H)
    lin_b = linb_ref[...]                     # (1, C)

    def gates_to_hc(iou, c_prev):
        i = jax.nn.sigmoid(iou[:, :H])
        o = jax.nn.sigmoid(iou[:, H:2 * H])
        u = jax.nn.sigmoid(iou[:, 2 * H:])    # sigmoid (matches the source), not tanh
        c = i * u + c_prev
        h = o * jnp.tanh(c)
        return h, c

    # --- leaf level (deepest): iou = W_iou(emb)*mask + b_iou ; c_prev = c_init --
    m_leaf = TB * (1 << depth)
    off_leaf = TB * ((1 << depth) - 1)
    iou0 = jnp.dot(emb_ref[...], w_iou,
                   preferred_element_type=f32) * mask_ref[...]
    h_leaf, c_leaf = gates_to_hc(iou0 + b_iou, c0_ref[...])
    h_scr[off_leaf:off_leaf + m_leaf, :] = h_leaf
    c_scr[off_leaf:off_leaf + m_leaf, :] = c_leaf

    # --- internal levels, bottom-up (statically unrolled; all offsets compile-time,
    #     all slices contiguous and 8-row aligned) --------------------------------
    for d in range(depth - 1, -1, -1):
        m = TB * (1 << d)                     # rows at this level (multiple of 8)
        off_p = TB * ((1 << d) - 1)           # this level's row offset
        off_c = TB * ((1 << (d + 1)) - 1)     # child level's row offset
        h_l = h_scr[off_c:off_c + m, :].astype(bf16)
        h_r = h_scr[off_c + m:off_c + 2 * m, :].astype(bf16)
        c_l = c_scr[off_c:off_c + m, :]
        c_r = c_scr[off_c + m:off_c + 2 * m, :]
        # f = sigmoid(U_f([h_l | h_r]) + b_f), as two half matmuls (no concat/reshape)
        f = jax.nn.sigmoid(
            jnp.dot(h_l, u_f_l, preferred_element_type=f32)
            + jnp.dot(h_r, u_f_r, preferred_element_type=f32) + u_f_b)
        c_sum = f[:, :H] * c_l + f[:, H:] * c_r
        iou = (jnp.dot(h_l, u_iou_l, preferred_element_type=f32)
               + jnp.dot(h_r, u_iou_r, preferred_element_type=f32) + b_iou)
        h_new, c_new = gates_to_hc(iou, c_sum)
        h_scr[off_p:off_p + m, :] = h_new
        c_scr[off_p:off_p + m, :] = c_new

    # --- classifier over every node's hidden state ------------------------------
    logits_ref[...] = (jnp.dot(h_scr[...].astype(bf16), lin_w,
                               preferred_element_type=f32) + lin_b)


# -----------------------------------------------------------------------------
# Row-layout bookkeeping (pure numpy, computed at trace time)
# -----------------------------------------------------------------------------
def _bit_reverse(v, nbits):
    r = 0
    for _ in range(nbits):
        r = (r << 1) | (v & 1)
        v >>= 1
    return r


def _build_layout(depth, num_trees, trees_per_block):
    """Kernel row layout: blocks of TB trees; within a block, level-major; within a
    level, rows ordered (bit-reversed heap path, tree). With that ordering the left
    children of level d are the first contiguous half of level d+1 and the right
    children the second half."""
    N = (1 << (depth + 1)) - 1
    L = 1 << depth
    TB = trees_per_block
    R = TB * N
    node_row = np.zeros((num_trees, N), dtype=np.int32)   # (tree, heap node) -> output row
    for b in range(num_trees):
        blk, t = divmod(b, TB)
        for d in range(depth + 1):
            for q in range(1 << d):
                n = (1 << d) - 1 + q
                p_rev = _bit_reverse(q, d)
                node_row[b, n] = blk * R + TB * ((1 << d) - 1) + p_rev * TB + t
    leaf_src = np.zeros((num_trees * L,), dtype=np.int32)  # kernel leaf row -> heap leaf idx
    for r in range(num_trees * L):
        blk, rem = divmod(r, TB * L)
        p_rev, t = divmod(rem, TB)
        leaf_src[r] = (blk * TB + t) * L + _bit_reverse(p_rev, depth)
    return node_row, leaf_src


# -----------------------------------------------------------------------------
# Forward wrapper
# -----------------------------------------------------------------------------
def tree_lstm_forward(params, wordid, mask, h0, c0, *, depth, trees_per_block=8):
    """wordid/mask: (B, N) int32 in heap order per tree; h0/c0: (B, N, h).
    Returns logits (B, N, num_classes). h0 is accepted for parity but never read
    (every node's h is recomputed, exactly as in the DGL propagation)."""
    del h0
    f32, bf16 = jnp.float32, jnp.bfloat16
    B, N = wordid.shape
    L = 1 << depth
    assert N == 2 * L - 1, "expects a complete binary tree in heap order"
    TB = trees_per_block
    assert B % TB == 0
    NB = B // TB
    H = c0.shape[-1]
    X = params["W_iou_T"].shape[0]
    C = params["lin_T"].shape[1]
    R = TB * N

    node_row_np, leaf_src_np = _build_layout(depth, B, TB)
    node_row = jnp.asarray(node_row_np)
    leaf_src = jnp.asarray(leaf_src_np)

    # Leaf-only embedding gather (internal nodes' iou0 is dead work: it is always
    # overwritten by U_iou(h_cat) in reduce_func), permuted into the kernel layout.
    ids_leaf = (wordid * mask)[:, N - L:].reshape(-1)           # (B*L,)
    emb_leaf = jnp.take(params["emb"], ids_leaf, axis=0)        # (B*L, X) f32
    mask_leaf = mask[:, N - L:].reshape(-1, 1).astype(f32)      # (B*L, 1)
    c0_leaf = c0[:, N - L:, :].reshape(-1, H)                   # (B*L, H)

    emb_in = jnp.take(emb_leaf, leaf_src, axis=0).astype(bf16)
    mask_in = jnp.take(mask_leaf, leaf_src, axis=0)
    c0_in = jnp.take(c0_leaf, leaf_src, axis=0)
    # TODO(synk): dropout on embeds / h is identity (inference mode).

    kernel = functools.partial(fused_tree_lstm_kernel, depth=depth,
                               h_size=H, trees_per_block=TB)

    def full(shape):  # whole-array block, fetched once (constant block index)
        return pl.BlockSpec(shape, lambda i: (0,) * len(shape))

    logits_flat = pl.pallas_call(
        kernel,
        grid=(NB,),
        in_specs=[
            pl.BlockSpec((TB * L, X), lambda i: (i, 0)),   # leaf embeddings (bf16)
            pl.BlockSpec((TB * L, 1), lambda i: (i, 0)),   # leaf mask
            pl.BlockSpec((TB * L, H), lambda i: (i, 0)),   # leaf c_init
            full((X, 3 * H)),                              # W_iou^T  (bf16)
            full((2 * H, 3 * H)),                          # U_iou^T  (bf16)
            full((1, 3 * H)),                              # b_iou
            full((2 * H, 2 * H)),                          # U_f^T    (bf16)
            full((1, 2 * H)),                              # U_f bias
            full((H, C)),                                  # linear^T (bf16)
            full((1, C)),                                  # linear bias
        ],
        out_specs=pl.BlockSpec((R, C), lambda i: (i, 0)),
        out_shape=jax.ShapeDtypeStruct((NB * R, C), f32),
        scratch_shapes=[pltpu.VMEM((R, H), f32),           # h (all nodes of the block)
                        pltpu.VMEM((R, H), f32)],          # c
        compiler_params=pltpu.CompilerParams(
            dimension_semantics=("parallel",)),            # megacore-shardable on v7x
    )(emb_in, mask_in, c0_in,
      params["W_iou_T"].astype(bf16), params["U_iou_T"].astype(bf16),
      params["b_iou"],
      params["U_f_T"].astype(bf16), params["U_f_b"],
      params["lin_T"].astype(bf16), params["lin_b"])

    # Map kernel rows back to (tree, heap-node) order.
    return jnp.take(logits_flat, node_row.reshape(-1), axis=0).reshape(B, N, C)


# -----------------------------------------------------------------------------
# Deterministic parameter init (shapes from the module __init__), f32 master copy
# -----------------------------------------------------------------------------
def init_params(key, num_vocabs, x_size, h_size, num_classes):
    ks = jax.random.split(key, 6)
    s = 0.1
    return {
        # nn.Embedding(num_vocabs, x_size)
        "emb": s * jax.random.normal(ks[0], (num_vocabs, x_size), jnp.float32),
        # nn.Linear(x_size, 3*h_size, bias=False)   -> stored pre-transposed (x, 3h)
        "W_iou_T": s * jax.random.normal(ks[1], (x_size, 3 * h_size), jnp.float32),
        # nn.Linear(2*h_size, 3*h_size, bias=False) -> (2h, 3h)
        "U_iou_T": s * jax.random.normal(ks[2], (2 * h_size, 3 * h_size), jnp.float32),
        # nn.Parameter(zeros(1, 3*h_size))
        "b_iou": jnp.zeros((1, 3 * h_size), jnp.float32),
        # nn.Linear(2*h_size, 2*h_size) -> (2h, 2h) + bias
        "U_f_T": s * jax.random.normal(ks[3], (2 * h_size, 2 * h_size), jnp.float32),
        "U_f_b": s * jax.random.normal(ks[4], (1, 2 * h_size), jnp.float32),
        # nn.Linear(h_size, num_classes)
        "lin_T": s * jax.random.normal(ks[5], (h_size, num_classes), jnp.float32),
        "lin_b": jnp.zeros((1, num_classes), jnp.float32),
    }


if __name__ == "__main__":
    num_vocabs, x_size, h_size, num_classes = 100, 32, 32, 5
    depth = 3                                # complete binary tree: 8 leaves, 15 nodes
    B = 16                                   # batch of trees
    TB = 8                                   # trees per grid step
    N = (1 << (depth + 1)) - 1
    L = 1 << depth

    key = jax.random.PRNGKey(0)
    k_par, k_word = jax.random.split(key)
    params = init_params(k_par, num_vocabs, x_size, h_size, num_classes)

    # Leaves (heap nodes 7..14) carry word ids (mask=1); internal nodes mask=0.
    wordid = jax.random.randint(k_word, (B, N), 0, num_vocabs, dtype=jnp.int32)
    mask = jnp.concatenate([jnp.zeros((B, N - L), jnp.int32),
                            jnp.ones((B, L), jnp.int32)], axis=1)
    h0 = jnp.zeros((B, N, h_size), jnp.float32)
    c0 = jnp.zeros((B, N, h_size), jnp.float32)

    fwd = jax.jit(functools.partial(tree_lstm_forward, depth=depth,
                                    trees_per_block=TB))
    logits = fwd(params, wordid, mask, h0, c0)
    jax.block_until_ready(logits)
    assert logits.shape == (B, N, num_classes)
    assert bool(jnp.all(jnp.isfinite(logits)))
    print("KERNEL_OK")
</pallas_src>

<mosaic_0001>
module attributes {stable_mosaic.version = 11 : i64} {
  func.func @fused_tree_lstm_kernel(%arg0: i32, %arg1: memref<64x32xbf16, #tpu.memory_space<vmem>>, %arg2: memref<64x1xf32, #tpu.memory_space<vmem>>, %arg3: memref<64x32xf32, #tpu.memory_space<vmem>>, %arg4: memref<32x96xbf16, #tpu.memory_space<vmem>>, %arg5: memref<64x96xbf16, #tpu.memory_space<vmem>>, %arg6: memref<1x96xf32, #tpu.memory_space<vmem>>, %arg7: memref<64x64xbf16, #tpu.memory_space<vmem>>, %arg8: memref<1x64xf32, #tpu.memory_space<vmem>>, %arg9: memref<32x5xbf16, #tpu.memory_space<vmem>>, %arg10: memref<1x5xf32, #tpu.memory_space<vmem>>, %arg11: memref<120x5xf32, #tpu.memory_space<vmem>>, %arg12: memref<120x32xf32, #tpu.memory_space<vmem>>, %arg13: memref<120x32xf32, #tpu.memory_space<vmem>>) attributes {dimension_semantics = [#tpu.dimension_semantics<parallel>], iteration_bounds = array<i64: 2>, scalar_prefetch = 0 : i64, scratch_operands = 2 : i64, tpu.core_type = #tpu.core_type<tc>, window_params = [{transform_indices = @transform_0, window_bounds = array<i64: 64, 32>}, {transform_indices = @transform_1, window_bounds = array<i64: 64, 1>}, {transform_indices = @transform_2, window_bounds = array<i64: 64, 32>}, {pipeline_mode = #tpu.pipeline_mode<synchronous>, transform_indices = @transform_3, window_bounds = array<i64: 32, 96>}, {pipeline_mode = #tpu.pipeline_mode<synchronous>, transform_indices = @transform_4, window_bounds = array<i64: 64, 96>}, {pipeline_mode = #tpu.pipeline_mode<synchronous>, transform_indices = @transform_5, window_bounds = array<i64: 1, 96>}, {pipeline_mode = #tpu.pipeline_mode<synchronous>, transform_indices = @transform_6, window_bounds = array<i64: 64, 64>}, {pipeline_mode = #tpu.pipeline_mode<synchronous>, transform_indices = @transform_7, window_bounds = array<i64: 1, 64>}, {pipeline_mode = #tpu.pipeline_mode<synchronous>, transform_indices = @transform_8, window_bounds = array<i64: 32, 5>}, {pipeline_mode = #tpu.pipeline_mode<synchronous>, transform_indices = @transform_9, window_bounds = array<i64: 1, 5>}, {transform_indices = @transform_10, window_bounds = array<i64: 120, 5>}]} {
    %c0 = arith.constant 0 : index
    %c0_0 = arith.constant 0 : index
    %0 = vector.load %arg4[%c0, %c0_0] : memref<32x96xbf16, #tpu.memory_space<vmem>>, vector<32x96xbf16>
    %c0_1 = arith.constant 0 : index
    %c0_2 = arith.constant 0 : index
    %1 = vector.load %arg5[%c0_1, %c0_2] : memref<64x96xbf16, #tpu.memory_space<vmem>>, vector<32x96xbf16>
    %c32 = arith.constant 32 : index
    %c0_3 = arith.constant 0 : index
    %2 = vector.load %arg5[%c32, %c0_3] : memref<64x96xbf16, #tpu.memory_space<vmem>>, vector<32x96xbf16>
    %c0_4 = arith.constant 0 : index
    %c0_5 = arith.constant 0 : index
    %3 = vector.load %arg7[%c0_4, %c0_5] : memref<64x64xbf16, #tpu.memory_space<vmem>>, vector<32x64xbf16>
    %c32_6 = arith.constant 32 : index
    %c0_7 = arith.constant 0 : index
    %4 = vector.load %arg7[%c32_6, %c0_7] : memref<64x64xbf16, #tpu.memory_space<vmem>>, vector<32x64xbf16>
    %c0_8 = arith.constant 0 : index
    %c0_9 = arith.constant 0 : index
    %5 = vector.load %arg9[%c0_8, %c0_9] : memref<32x5xbf16, #tpu.memory_space<vmem>>, vector<32x5xbf16>
    %c0_10 = arith.constant 0 : index
    %c0_11 = arith.constant 0 : index
    %6 = vector.load %arg6[%c0_10, %c0_11] : memref<1x96xf32, #tpu.memory_space<vmem>>, vector<1x96xf32>
    %c0_12 = arith.constant 0 : index
    %c0_13 = arith.constant 0 : index
    %7 = vector.load %arg8[%c0_12, %c0_13] : memref<1x64xf32, #tpu.memory_space<vmem>>, vector<1x64xf32>
    %c0_14 = arith.constant 0 : index
    %c0_15 = arith.constant 0 : index
    %8 = vector.load %arg10[%c0_14, %c0_15] : memref<1x5xf32, #tpu.memory_space<vmem>>, vector<1x5xf32>
    %c0_16 = arith.constant 0 : index
    %c0_17 = arith.constant 0 : index
    %9 = vector.load %arg1[%c0_16, %c0_17] : memref<64x32xbf16, #tpu.memory_space<vmem>>, vector<64x32xbf16>
    %cst = arith.constant dense<0.000000e+00> : vector<64x96xf32>
    %10 = tpu.matmul %9, %0, %cst {dimension_numbers = #tpu.dot_dimension_numbers<[1], [0], [0], [1], [0, 0, 1, 1], [], []>} : vector<64x32xbf16>, vector<32x96xbf16>, vector<64x96xf32> -> vector<64x96xf32>
    %c0_18 = arith.constant 0 : index
    %c0_19 = arith.constant 0 : index
    %11 = vector.load %arg2[%c0_18, %c0_19] : memref<64x1xf32, #tpu.memory_space<vmem>>, vector<64x1xf32>
    %12 = vector.broadcast %11 : vector<64x1xf32> to vector<64x96xf32>
    %13 = arith.mulf %10, %12 : vector<64x96xf32>
    %14 = vector.broadcast %6 : vector<1x96xf32> to vector<64x96xf32>
    %15 = arith.addf %13, %14 : vector<64x96xf32>
    %c0_20 = arith.constant 0 : index
    %c0_21 = arith.constant 0 : index
    %16 = vector.load %arg3[%c0_20, %c0_21] : memref<64x32xf32, #tpu.memory_space<vmem>>, vector<64x32xf32>
    %17 = vector.extract_strided_slice %15 {offsets = [0, 0], sizes = [64, 32], strides = [1, 1]} : vector<64x96xf32> to vector<64x32xf32>
    %18 = arith.negf %17 : vector<64x32xf32>
    %19 = math.exp %18 : vector<64x32xf32>
    %cst_22 = arith.constant 1.000000e+00 : f32
    %20 = vector.broadcast %cst_22 : f32 to vector<64x32xf32>
    %21 = arith.addf %20, %19 : vector<64x32xf32>
    %22 = arith.divf %20, %21 : vector<64x32xf32>
    %23 = vector.extract_strided_slice %15 {offsets = [0, 32], sizes = [64, 32], strides = [1, 1]} : vector<64x96xf32> to vector<64x32xf32>
    %24 = arith.negf %23 : vector<64x32xf32>
    %25 = math.exp %24 : vector<64x32xf32>
    %cst_23 = arith.constant 1.000000e+00 : f32
    %26 = vector.broadcast %cst_23 : f32 to vector<64x32xf32>
    %27 = arith.addf %26, %25 : vector<64x32xf32>
    %28 = arith.divf %26, %27 : vector<64x32xf32>
    %29 = vector.extract_strided_slice %15 {offsets = [0, 64], sizes = [64, 32], strides = [1, 1]} : vector<64x96xf32> to vector<64x32xf32>
    %30 = arith.negf %29 : vector<64x32xf32>
    %31 = math.exp %30 : vector<64x32xf32>
    %cst_24 = arith.constant 1.000000e+00 : f32
    %32 = vector.broadcast %cst_24 : f32 to vector<64x32xf32>
    %33 = arith.addf %32, %31 : vector<64x32xf32>
    %34 = arith.divf %32, %33 : vector<64x32xf32>
    %35 = arith.mulf %22, %34 : vector<64x32xf32>
    %36 = arith.addf %35, %16 : vector<64x32xf32>
    %37 = math.tanh %36 : vector<64x32xf32>
    %38 = arith.mulf %28, %37 : vector<64x32xf32>
    %c56 = arith.constant 56 : index
    %c0_25 = arith.constant 0 : index
    %39 = vector.load %arg12[%c56, %c0_25] : memref<120x32xf32, #tpu.memory_space<vmem>>, vector<64x32xf32>
    tpu.vector_store %arg12[%c56, %c0_25], %38 {strides = array<i32>} : memref<120x32xf32, #tpu.memory_space<vmem>>, vector<64x32xf32>,
    %c56_26 = arith.constant 56 : index
    %c0_27 = arith.constant 0 : index
    %40 = vector.load %arg13[%c56_26, %c0_27] : memref<120x32xf32, #tpu.memory_space<vmem>>, vector<64x32xf32>
    tpu.vector_store %arg13[%c56_26, %c0_27], %36 {strides = array<i32>} : memref<120x32xf32, #tpu.memory_space<vmem>>, vector<64x32xf32>,
    %c56_28 = arith.constant 56 : index
    %c0_29 = arith.constant 0 : index
    %41 = vector.load %arg12[%c56_28, %c0_29] : memref<120x32xf32, #tpu.memory_space<vmem>>, vector<32x32xf32>
    %42 = arith.truncf %41 : vector<32x32xf32> to vector<32x32xbf16>
    %c88 = arith.constant 88 : index
    %c0_30 = arith.constant 0 : index
    %43 = vector.load %arg12[%c88, %c0_30] : memref<120x32xf32, #tpu.memory_space<vmem>>, vector<32x32xf32>
    %44 = arith.truncf %43 : vector<32x32xf32> to vector<32x32xbf16>
    %c56_31 = arith.constant 56 : index
    %c0_32 = arith.constant 0 : index
    %45 = vector.load %arg13[%c56_31, %c0_32] : memref<120x32xf32, #tpu.memory_space<vmem>>, vector<32x32xf32>
    %c88_33 = arith.constant 88 : index
    %c0_34 = arith.constant 0 : index
    %46 = vector.load %arg13[%c88_33, %c0_34] : memref<120x32xf32, #tpu.memory_space<vmem>>, vector<32x32xf32>
    %cst_35 = arith.constant dense<0.000000e+00> : vector<32x64xf32>
    %47 = tpu.matmul %42, %3, %cst_35 {dimension_numbers = #tpu.dot_dimension_numbers<[1], [0], [0], [1], [0, 0, 1, 1], [], []>} : vector<32x32xbf16>, vector<32x64xbf16>, vector<32x64xf32> -> vector<32x64xf32>
    %cst_36 = arith.constant dense<0.000000e+00> : vector<32x64xf32>
    %48 = tpu.matmul %44, %4, %cst_36 {dimension_numbers = #tpu.dot_dimension_numbers<[1], [0], [0], [1], [0, 0, 1, 1], [], []>} : vector<32x32xbf16>, vector<32x64xbf16>, vector<32x64xf32> -> vector<32x64xf32>
    %49 = arith.addf %47, %48 : vector<32x64xf32>
    %50 = vector.broadcast %7 : vector<1x64xf32> to vector<32x64xf32>
    %51 = arith.addf %49, %50 : vector<32x64xf32>
    %52 = arith.negf %51 : vector<32x64xf32>
    %53 = math.exp %52 : vector<32x64xf32>
    %cst_37 = arith.constant 1.000000e+00 : f32
    %54 = vector.broadcast %cst_37 : f32 to vector<32x64xf32>
    %55 = arith.addf %54, %53 : vector<32x64xf32>
    %56 = arith.divf %54, %55 : vector<32x64xf32>
    %57 = vector.extract_strided_slice %56 {offsets = [0, 0], sizes = [32, 32], strides = [1, 1]} : vector<32x64xf32> to vector<32x32xf32>
    %58 = arith.mulf %57, %45 : vector<32x32xf32>
    %59 = vector.extract_strided_slice %56 {offsets = [0, 32], sizes = [32, 32], strides = [1, 1]} : vector<32x64xf32> to vector<32x32xf32>
    %60 = arith.mulf %59, %46 : vector<32x32xf32>
    %61 = arith.addf %58, %60 : vector<32x32xf32>
    %cst_38 = arith.constant dense<0.000000e+00> : vector<32x96xf32>
    %62 = tpu.matmul %42, %1, %cst_38 {dimension_numbers = #tpu.dot_dimension_numbers<[1], [0], [0], [1], [0, 0, 1, 1], [], []>} : vector<32x32xbf16>, vector<32x96xbf16>, vector<32x96xf32> -> vector<32x96xf32>
    %cst_39 = arith.constant dense<0.000000e+00> : vector<32x96xf32>
    %63 = tpu.matmul %44, %2, %cst_39 {dimension_numbers = #tpu.dot_dimension_numbers<[1], [0], [0], [1], [0, 0, 1, 1], [], []>} : vector<32x32xbf16>, vector<32x96xbf16>, vector<32x96xf32> -> vector<32x96xf32>
    %64 = arith.addf %62, %63 : vector<32x96xf32>
    %65 = vector.broadcast %6 : vector<1x96xf32> to vector<32x96xf32>
    %66 = arith.addf %64, %65 : vector<32x96xf32>
    %67 = vector.extract_strided_slice %66 {offsets = [0, 0], sizes = [32, 32], strides = [1, 1]} : vector<32x96xf32> to vector<32x32xf32>
    %68 = arith.negf %67 : vector<32x32xf32>
    %69 = math.exp %68 : vector<32x32xf32>
    %cst_40 = arith.constant 1.000000e+00 : f32
    %70 = vector.broadcast %cst_40 : f32 to vector<32x32xf32>
    %71 = arith.addf %70, %69 : vector<32x32xf32>
    %72 = arith.divf %70, %71 : vector<32x32xf32>
    %73 = vector.extract_strided_slice %66 {offsets = [0, 32], sizes = [32, 32], strides = [1, 1]} : vector<32x96xf32> to vector<32x32xf32>
    %74 = arith.negf %73 : vector<32x32xf32>
    %75 = math.exp %74 : vector<32x32xf32>
    %cst_41 = arith.constant 1.000000e+00 : f32
    %76 = vector.broadcast %cst_41 : f32 to vector<32x32xf32>
    %77 = arith.addf %76, %75 : vector<32x32xf32>
    %78 = arith.divf %76, %77 : vector<32x32xf32>
    %79 = vector.extract_strided_slice %66 {offsets = [0, 64], sizes = [32, 32], strides = [1, 1]} : vector<32x96xf32> to vector<32x32xf32>
    %80 = arith.negf %79 : vector<32x32xf32>
    %81 = math.exp %80 : vector<32x32xf32>
    %cst_42 = arith.constant 1.000000e+00 : f32
    %82 = vector.broadcast %cst_42 : f32 to vector<32x32xf32>
    %83 = arith.addf %82, %81 : vector<32x32xf32>
    %84 = arith.divf %82, %83 : vector<32x32xf32>
    %85 = arith.mulf %72, %84 : vector<32x32xf32>
    %86 = arith.addf %85, %61 : vector<32x32xf32>
    %87 = math.tanh %86 : vector<32x32xf32>
    %88 = arith.mulf %78, %87 : vector<32x32xf32>
    %c24 = arith.constant 24 : index
    %c0_43 = arith.constant 0 : index
    %89 = vector.load %arg12[%c24, %c0_43] : memref<120x32xf32, #tpu.memory_space<vmem>>, vector<32x32xf32>
    tpu.vector_store %arg12[%c24, %c0_43], %88 {strides = array<i32>} : memref<120x32xf32, #tpu.memory_space<vmem>>, vector<32x32xf32>,
    %c24_44 = arith.constant 24 : index
    %c0_45 = arith.constant 0 : index
    %90 = vector.load %arg13[%c24_44, %c0_45] : memref<120x32xf32, #tpu.memory_space<vmem>>, vector<32x32xf32>
    tpu.vector_store %arg13[%c24_44, %c0_45], %86 {strides = array<i32>} : memref<120x32xf32, #tpu.memory_space<vmem>>, vector<32x32xf32>,
    %c24_46 = arith.constant 24 : index
    %c0_47 = arith.constant 0 : index
    %91 = vector.load %arg12[%c24_46, %c0_47] : memref<120x32xf32, #tpu.memory_space<vmem>>, vector<16x32xf32>
    %92 = arith.truncf %91 : vector<16x32xf32> to vector<16x32xbf16>
    %c40 = arith.constant 40 : index
    %c0_48 = arith.constant 0 : index
    %93 = vector.load %arg12[%c40, %c0_48] : memref<120x32xf32, #tpu.memory_space<vmem>>, vector<16x32xf32>
    %94 = arith.truncf %93 : vector<16x32xf32> to vector<16x32xbf16>
    %c24_49 = arith.constant 24 : index
    %c0_50 = arith.constant 0 : index
    %95 = vector.load %arg13[%c24_49, %c0_50] : memref<120x32xf32, #tpu.memory_space<vmem>>, vector<16x32xf32>
    %c40_51 = arith.constant 40 : index
    %c0_52 = arith.constant 0 : index
    %96 = vector.load %arg13[%c40_51, %c0_52] : memref<120x32xf32, #tpu.memory_space<vmem>>, vector<16x32xf32>
    %cst_53 = arith.constant dense<0.000000e+00> : vector<16x64xf32>
    %97 = tpu.matmul %92, %3, %cst_53 {dimension_numbers = #tpu.dot_dimension_numbers<[1], [0], [0], [1], [0, 0, 1, 1], [], []>} : vector<16x32xbf16>, vector<32x64xbf16>, vector<16x64xf32> -> vector<16x64xf32>
    %cst_54 = arith.constant dense<0.000000e+00> : vector<16x64xf32>
    %98 = tpu.matmul %94, %4, %cst_54 {dimension_numbers = #tpu.dot_dimension_numbers<[1], [0], [0], [1], [0, 0, 1, 1], [], []>} : vector<16x32xbf16>, vector<32x64xbf16>, vector<16x64xf32> -> vector<16x64xf32>
    %99 = arith.addf %97, %98 : vector<16x64xf32>
    %100 = vector.broadcast %7 : vector<1x64xf32> to vector<16x64xf32>
    %101 = arith.addf %99, %100 : vector<16x64xf32>
    %102 = arith.negf %101 : vector<16x64xf32>
    %103 = math.exp %102 : vector<16x64xf32>
    %cst_55 = arith.constant 1.000000e+00 : f32
    %104 = vector.broadcast %cst_55 : f32 to vector<16x64xf32>
    %105 = arith.addf %104, %103 : vector<16x64xf32>
    %106 = arith.divf %104, %105 : vector<16x64xf32>
    %107 = vector.extract_strided_slice %106 {offsets = [0, 0], sizes = [16, 32], strides = [1, 1]} : vector<16x64xf32> to vector<16x32xf32>
    %108 = arith.mulf %107, %95 : vector<16x32xf32>
    %109 = vector.extract_strided_slice %106 {offsets = [0, 32], sizes = [16, 32], strides = [1, 1]} : vector<16x64xf32> to vector<16x32xf32>
    %110 = arith.mulf %109, %96 : vector<16x32xf32>
    %111 = arith.addf %108, %110 : vector<16x32xf32>
    %cst_56 = arith.constant dense<0.000000e+00> : vector<16x96xf32>
    %112 = tpu.matmul %92, %1, %cst_56 {dimension_numbers = #tpu.dot_dimension_numbers<[1], [0], [0], [1], [0, 0, 1, 1], [], []>} : vector<16x32xbf16>, vector<32x96xbf16>, vector<16x96xf32> -> vector<16x96xf32>
    %cst_57 = arith.constant dense<0.000000e+00> : vector<16x96xf32>
    %113 = tpu.matmul %94, %2, %cst_57 {dimension_numbers = #tpu.dot_dimension_numbers<[1], [0], [0], [1], [0, 0, 1, 1], [], []>} : vector<16x32xbf16>, vector<32x96xbf16>, vector<16x96xf32> -> vector<16x96xf32>
    %114 = arith.addf %112, %113 : vector<16x96xf32>
    %115 = vector.broadcast %6 : vector<1x96xf32> to vector<16x96xf32>
    %116 = arith.addf %114, %115 : vector<16x96xf32>
    %117 = vector.extract_strided_slice %116 {offsets = [0, 0], sizes = [16, 32], strides = [1, 1]} : vector<16x96xf32> to vector<16x32xf32>
    %118 = arith.negf %117 : vector<16x32xf32>
    %119 = math.exp %118 : vector<16x32xf32>
    %cst_58 = arith.constant 1.000000e+00 : f32
    %120 = vector.broadcast %cst_58 : f32 to vector<16x32xf32>
    %121 = arith.addf %120, %119 : vector<16x32xf32>
    %122 = arith.divf %120, %121 : vector<16x32xf32>
    %123 = vector.extract_strided_slice %116 {offsets = [0, 32], sizes = [16, 32], strides = [1, 1]} : vector<16x96xf32> to vector<16x32xf32>
    %124 = arith.negf %123 : vector<16x32xf32>
    %125 = math.exp %124 : vector<16x32xf32>
    %cst_59 = arith.constant 1.000000e+00 : f32
    %126 = vector.broadcast %cst_59 : f32 to vector<16x32xf32>
    %127 = arith.addf %126, %125 : vector<16x32xf32>
    %128 = arith.divf %126, %127 : vector<16x32xf32>
    %129 = vector.extract_strided_slice %116 {offsets = [0, 64], sizes = [16, 32], strides = [1, 1]} : vector<16x96xf32> to vector<16x32xf32>
    %130 = arith.negf %129 : vector<16x32xf32>
    %131 = math.exp %130 : vector<16x32xf32>
    %cst_60 = arith.constant 1.000000e+00 : f32
    %132 = vector.broadcast %cst_60 : f32 to vector<16x32xf32>
    %133 = arith.addf %132, %131 : vector<16x32xf32>
    %134 = arith.divf %132, %133 : vector<16x32xf32>
    %135 = arith.mulf %122, %134 : vector<16x32xf32>
    %136 = arith.addf %135, %111 : vector<16x32xf32>
    %137 = math.tanh %136 : vector<16x32xf32>
    %138 = arith.mulf %128, %137 : vector<16x32xf32>
    %c8 = arith.constant 8 : index
    %c0_61 = arith.constant 0 : index
    %139 = vector.load %arg12[%c8, %c0_61] : memref<120x32xf32, #tpu.memory_space<vmem>>, vector<16x32xf32>
    tpu.vector_store %arg12[%c8, %c0_61], %138 {strides = array<i32>} : memref<120x32xf32, #tpu.memory_space<vmem>>, vector<16x32xf32>,
    %c8_62 = arith.constant 8 : index
    %c0_63 = arith.constant 0 : index
    %140 = vector.load %arg13[%c8_62, %c0_63] : memref<120x32xf32, #tpu.memory_space<vmem>>, vector<16x32xf32>
    tpu.vector_store %arg13[%c8_62, %c0_63], %136 {strides = array<i32>} : memref<120x32xf32, #tpu.memory_space<vmem>>, vector<16x32xf32>,
    %c8_64 = arith.constant 8 : index
    %c0_65 = arith.constant 0 : index
    %141 = vector.load %arg12[%c8_64, %c0_65] : memref<120x32xf32, #tpu.memory_space<vmem>>, vector<8x32xf32>
    %142 = arith.truncf %141 : vector<8x32xf32> to vector<8x32xbf16>
    %c16 = arith.constant 16 : index
    %c0_66 = arith.constant 0 : index
    %143 = vector.load %arg12[%c16, %c0_66] : memref<120x32xf32, #tpu.memory_space<vmem>>, vector<8x32xf32>
    %144 = arith.truncf %143 : vector<8x32xf32> to vector<8x32xbf16>
    %c8_67 = arith.constant 8 : index
    %c0_68 = arith.constant 0 : index
    %145 = vector.load %arg13[%c8_67, %c0_68] : memref<120x32xf32, #tpu.memory_space<vmem>>, vector<8x32xf32>
    %c16_69 = arith.constant 16 : index
    %c0_70 = arith.constant 0 : index
    %146 = vector.load %arg13[%c16_69, %c0_70] : memref<120x32xf32, #tpu.memory_space<vmem>>, vector<8x32xf32>
    %cst_71 = arith.constant dense<0.000000e+00> : vector<8x64xf32>
    %147 = tpu.matmul %142, %3, %cst_71 {dimension_numbers = #tpu.dot_dimension_numbers<[1], [0], [0], [1], [0, 0, 1, 1], [], []>} : vector<8x32xbf16>, vector<32x64xbf16>, vector<8x64xf32> -> vector<8x64xf32>
    %cst_72 = arith.constant dense<0.000000e+00> : vector<8x64xf32>
    %148 = tpu.matmul %144, %4, %cst_72 {dimension_numbers = #tpu.dot_dimension_numbers<[1], [0], [0], [1], [0, 0, 1, 1], [], []>} : vector<8x32xbf16>, vector<32x64xbf16>, vector<8x64xf32> -> vector<8x64xf32>
    %149 = arith.addf %147, %148 : vector<8x64xf32>
    %150 = vector.broadcast %7 : vector<1x64xf32> to vector<8x64xf32>
    %151 = arith.addf %149, %150 : vector<8x64xf32>
    %152 = arith.negf %151 : vector<8x64xf32>
    %153 = math.exp %152 : vector<8x64xf32>
    %cst_73 = arith.constant 1.000000e+00 : f32
    %154 = vector.broadcast %cst_73 : f32 to vector<8x64xf32>
    %155 = arith.addf %154, %153 : vector<8x64xf32>
    %156 = arith.divf %154, %155 : vector<8x64xf32>
    %157 = vector.extract_strided_slice %156 {offsets = [0, 0], sizes = [8, 32], strides = [1, 1]} : vector<8x64xf32> to vector<8x32xf32>
    %158 = arith.mulf %157, %145 : vector<8x32xf32>
    %159 = vector.extract_strided_slice %156 {offsets = [0, 32], sizes = [8, 32], strides = [1, 1]} : vector<8x64xf32> to vector<8x32xf32>
    %160 = arith.mulf %159, %146 : vector<8x32xf32>
    %161 = arith.addf %158, %160 : vector<8x32xf32>
    %cst_74 = arith.constant dense<0.000000e+00> : vector<8x96xf32>
    %162 = tpu.matmul %142, %1, %cst_74 {dimension_numbers = #tpu.dot_dimension_numbers<[1], [0], [0], [1], [0, 0, 1, 1], [], []>} : vector<8x32xbf16>, vector<32x96xbf16>, vector<8x96xf32> -> vector<8x96xf32>
    %cst_75 = arith.constant dense<0.000000e+00> : vector<8x96xf32>
    %163 = tpu.matmul %144, %2, %cst_75 {dimension_numbers = #tpu.dot_dimension_numbers<[1], [0], [0], [1], [0, 0, 1, 1], [], []>} : vector<8x32xbf16>, vector<32x96xbf16>, vector<8x96xf32> -> vector<8x96xf32>
    %164 = arith.addf %162, %163 : vector<8x96xf32>
    %165 = vector.broadcast %6 : vector<1x96xf32> to vector<8x96xf32>
    %166 = arith.addf %164, %165 : vector<8x96xf32>
    %167 = vector.extract_strided_slice %166 {offsets = [0, 0], sizes = [8, 32], strides = [1, 1]} : vector<8x96xf32> to vector<8x32xf32>
    %168 = arith.negf %167 : vector<8x32xf32>
    %169 = math.exp %168 : vector<8x32xf32>
    %cst_76 = arith.constant 1.000000e+00 : f32
    %170 = vector.broadcast %cst_76 : f32 to vector<8x32xf32>
    %171 = arith.addf %170, %169 : vector<8x32xf32>
    %172 = arith.divf %170, %171 : vector<8x32xf32>
    %173 = vector.extract_strided_slice %166 {offsets = [0, 32], sizes = [8, 32], strides = [1, 1]} : vector<8x96xf32> to vector<8x32xf32>
    %174 = arith.negf %173 : vector<8x32xf32>
    %175 = math.exp %174 : vector<8x32xf32>
    %cst_77 = arith.constant 1.000000e+00 : f32
    %176 = vector.broadcast %cst_77 : f32 to vector<8x32xf32>
    %177 = arith.addf %176, %175 : vector<8x32xf32>
    %178 = arith.divf %176, %177 : vector<8x32xf32>
    %179 = vector.extract_strided_slice %166 {offsets = [0, 64], sizes = [8, 32], strides = [1, 1]} : vector<8x96xf32> to vector<8x32xf32>
    %180 = arith.negf %179 : vector<8x32xf32>
    %181 = math.exp %180 : vector<8x32xf32>
    %cst_78 = arith.constant 1.000000e+00 : f32
    %182 = vector.broadcast %cst_78 : f32 to vector<8x32xf32>
    %183 = arith.addf %182, %181 : vector<8x32xf32>
    %184 = arith.divf %182, %183 : vector<8x32xf32>
    %185 = arith.mulf %172, %184 : vector<8x32xf32>
    %186 = arith.addf %185, %161 : vector<8x32xf32>
    %187 = math.tanh %186 : vector<8x32xf32>
    %188 = arith.mulf %178, %187 : vector<8x32xf32>
    %c0_79 = arith.constant 0 : index
    %c0_80 = arith.constant 0 : index
    %189 = vector.load %arg12[%c0_79, %c0_80] : memref<120x32xf32, #tpu.memory_space<vmem>>, vector<8x32xf32>
    tpu.vector_store %arg12[%c0_79, %c0_80], %188 {strides = array<i32>} : memref<120x32xf32, #tpu.memory_space<vmem>>, vector<8x32xf32>,
    %c0_81 = arith.constant 0 : index
    %c0_82 = arith.constant 0 : index
    %190 = vector.load %arg13[%c0_81, %c0_82] : memref<120x32xf32, #tpu.memory_space<vmem>>, vector<8x32xf32>
    tpu.vector_store %arg13[%c0_81, %c0_82], %186 {strides = array<i32>} : memref<120x32xf32, #tpu.memory_space<vmem>>, vector<8x32xf32>,
    %c0_83 = arith.constant 0 : index
    %c0_84 = arith.constant 0 : index
    %191 = vector.load %arg12[%c0_83, %c0_84] : memref<120x32xf32, #tpu.memory_space<vmem>>, vector<120x32xf32>
    %192 = arith.truncf %191 : vector<120x32xf32> to vector<120x32xbf16>
    %cst_85 = arith.constant dense<0.000000e+00> : vector<120x5xf32>
    %193 = tpu.matmul %192, %5, %cst_85 {dimension_numbers = #tpu.dot_dimension_numbers<[1], [0], [0], [1], [0, 0, 1, 1], [], []>} : vector<120x32xbf16>, vector<32x5xbf16>, vector<120x5xf32> -> vector<120x5xf32>
    %194 = vector.broadcast %8 : vector<1x5xf32> to vector<120x5xf32>
    %195 = arith.addf %193, %194 : vector<120x5xf32>
    %c0_86 = arith.constant 0 : index
    %c0_87 = arith.constant 0 : index
    %196 = vector.load %arg11[%c0_86, %c0_87] : memref<120x5xf32, #tpu.memory_space<vmem>>, vector<120x5xf32>
    tpu.vector_store %arg11[%c0_86, %c0_87], %195 {strides = array<i32>} : memref<120x5xf32, #tpu.memory_space<vmem>>, vector<120x5xf32>,
    return
  }
  func.func @transform_0(%arg0: i32) -> (i32, i32) {
    %c0_i32 = arith.constant 0 : i32
    %c0_i32_0 = arith.constant 0 : i32
    return %arg0, %c0_i32 : i32, i32
  }
  func.func @transform_1(%arg0: i32) -> (i32, i32) {
    %c0_i32 = arith.constant 0 : i32
    %c0_i32_0 = arith.constant 0 : i32
    return %arg0, %c0_i32 : i32, i32
  }
  func.func @transform_2(%arg0: i32) -> (i32, i32) {
    %c0_i32 = arith.constant 0 : i32
    %c0_i32_0 = arith.constant 0 : i32
    return %arg0, %c0_i32 : i32, i32
  }
  func.func @transform_3(%arg0: i32) -> (i32, i32) {
    %c0_i32 = arith.constant 0 : i32
    %c0_i32_0 = arith.constant 0 : i32
    %c0_i32_1 = arith.constant 0 : i32
    return %c0_i32, %c0_i32_0 : i32, i32
  }
  func.func @transform_4(%arg0: i32) -> (i32, i32) {
    %c0_i32 = arith.constant 0 : i32
    %c0_i32_0 = arith.constant 0 : i32
    %c0_i32_1 = arith.constant 0 : i32
    return %c0_i32, %c0_i32_0 : i32, i32
  }
  func.func @transform_5(%arg0: i32) -> (i32, i32) {
    %c0_i32 = arith.constant 0 : i32
    %c0_i32_0 = arith.constant 0 : i32
    %c0_i32_1 = arith.constant 0 : i32
    return %c0_i32, %c0_i32_0 : i32, i32
  }
  func.func @transform_6(%arg0: i32) -> (i32, i32) {
    %c0_i32 = arith.constant 0 : i32
    %c0_i32_0 = arith.constant 0 : i32
    %c0_i32_1 = arith.constant 0 : i32
    return %c0_i32, %c0_i32_0 : i32, i32
  }
  func.func @transform_7(%arg0: i32) -> (i32, i32) {
    %c0_i32 = arith.constant 0 : i32
    %c0_i32_0 = arith.constant 0 : i32
    %c0_i32_1 = arith.constant 0 : i32
    return %c0_i32, %c0_i32_0 : i32, i32
  }
  func.func @transform_8(%arg0: i32) -> (i32, i32) {
    %c0_i32 = arith.constant 0 : i32
    %c0_i32_0 = arith.constant 0 : i32
    %c0_i32_1 = arith.constant 0 : i32
    return %c0_i32, %c0_i32_0 : i32, i32
  }
  func.func @transform_9(%arg0: i32) -> (i32, i32) {
    %c0_i32 = arith.constant 0 : i32
    %c0_i32_0 = arith.constant 0 : i32
    %c0_i32_1 = arith.constant 0 : i32
    return %c0_i32, %c0_i32_0 : i32, i32
  }
  func.func @transform_10(%arg0: i32) -> (i32, i32) {
    %c0_i32 = arith.constant 0 : i32
    %c0_i32_0 = arith.constant 0 : i32
    return %arg0, %c0_i32 : i32, i32
  }
}

</mosaic_0001>

<llo_original>
// kernel: tree_lstm_forward.1
$region0: #{tree_lstm_forward.1}
  #allocation0 [shape = 'u32[]', space=smem, size = 0x4, offset = 0x4, fixed_abs, tag = 'smem constant byte address 0x4 - core index']
  #allocation1 [shape = 'u32[144,128]{1,0:T(1,128)}', space=vmem, size = 0x12000, scoped, tag = 'internal scratch']
  #allocation2 [shape = 'f32[120,32]{1,0:T(8,128)}', space=vmem, size = 0xf000, scoped, tag = 'scratch operand']
  #allocation3 [shape = 'f32[120,32]{1,0:T(8,128)}', space=vmem, size = 0xf000, scoped, tag = 'scratch operand']
  %s0 = inlined_call_operand.vmem [shape: bf16[128,32], index: 0, kind: input, shape index: {}]
  %s1 = inlined_call_operand.vmem [shape: f32[128,1], index: 1, kind: input, shape index: {}]
  %s2 = inlined_call_operand.vmem [shape: f32[128,32], index: 2, kind: input, shape index: {}]
  %s3 = inlined_call_operand.vmem [shape: bf16[32,96], index: 3, kind: input, shape index: {}]
  %s4 = inlined_call_operand.vmem [shape: bf16[64,96], index: 4, kind: input, shape index: {}]
  %s5 = inlined_call_operand.vmem [shape: f32[1,96], index: 5, kind: input, shape index: {}]
  %s6 = inlined_call_operand.vmem [shape: bf16[64,64], index: 6, kind: input, shape index: {}]
  %s7 = inlined_call_operand.vmem [shape: f32[1,64], index: 7, kind: input, shape index: {}]
  %s8 = inlined_call_operand.vmem [shape: bf16[32,5], index: 8, kind: input, shape index: {}]
  %s9 = inlined_call_operand.vmem [shape: f32[1,5], index: 9, kind: input, shape index: {}]
  %s10 = inlined_call_operand.vmem [shape: f32[240,5], index: 10, kind: output, shape index: {}]
  %s11 = sld [smem:[#allocation0]]
  $region73: #{tree_lstm_forward.1} parent=0
    _
  %s13 = ssub.s32 1, %s11
  %s14 = scalar_select 0, %s13, %s11
  loop: start=0, step=1, limit=4
  $region2: #{tree_lstm_forward.1} parent=0 // loop_pre_header
    _
  $region3: #{tree_lstm_forward.1} parent=0 // loop_header
    %s16 = sphi 0, %s20
    %p17 = scmp.ge.s32.totalorder %s16, 4
    %s26 = sphi 0, %s28
    %s29 = sphi 0, %s26
    %s30 = sphi 0, %s29
    %s46 = sphi 0, %s30
    %s52 = sphi 0, %s54
    %s55 = sphi 0, %s52
    %s56 = sphi 0, %s55
    %s72 = sphi 0, %s56
    %s78 = sphi 0, %s80
    %s81 = sphi 0, %s78
    %s82 = sphi 0, %s81
    %s98 = sphi 0, %s82
    %s102 = sphi 0, %s102
    %s104 = sphi 0, %s102
    %s105 = sphi 0, %s104
    %s119 = sphi 0, %s105
    %s123 = sphi 0, %s123
    %s125 = sphi 0, %s123
    %s126 = sphi 0, %s125
    %s140 = sphi 0, %s126
    %s144 = sphi 0, %s144
    %s146 = sphi 0, %s144
    %s147 = sphi 0, %s146
    %s161 = sphi 0, %s147
    %s165 = sphi 0, %s165
    %s167 = sphi 0, %s165
    %s168 = sphi 0, %s167
    %s182 = sphi 0, %s168
    %s186 = sphi 0, %s186
    %s188 = sphi 0, %s186
    %s189 = sphi 0, %s188
    %s203 = sphi 0, %s189
    %s207 = sphi 0, %s207
    %s209 = sphi 0, %s207
    %s210 = sphi 0, %s209
    %s224 = sphi 0, %s210
    %s228 = sphi 0, %s228
    %s230 = sphi 0, %s228
    %s231 = sphi 0, %s230
    %s245 = sphi 0, %s231
    %s251 = sphi 0, %s253
    %s254 = sphi 0, %s251
    %s255 = sphi 0, %s254
    %s271 = sphi 0, %s255
  $region4: #{tree_lstm_forward.1} parent=0 // loop_header_branch
    %19 = sbr.rel (%p17) target = $region8
  $region5: #{tree_lstm_forward.1} parent=0 // loop_body
    %s21 = ssub.s32 %s16, 1
    %s22 = ssub.s32 %s16, 2
    %s23 = sadd.s32 %s16, 1
    %s24 = ssub.s32 %s16, %s23
    %p25 = scmp.eq.s32.totalorder %s24, 0
    %s27 = sadd.s32 %s26, 1
    %s28 = scalar_select %p25, %s26, %s27
    %p31 = pneg %p25
    %p32 = scmp.eq.s32.totalorder %s16, 1
    %p33 = por %p31, %p32
    %p34 = scmp.ne.s32.totalorder %s26, %s29
    %p35 = scmp.eq.s32.totalorder %s16, 0
    %p36 = por %p34, %p35
    %p37 = scmp.ne.s32.totalorder %s26, %s29
    %p38 = scmp.eq.s32.totalorder %s21, 1
    %p39 = por %p37, %p38
    %p40 = scmp.ne.s32.totalorder %s29, %s30
    %p41 = scmp.eq.s32.totalorder %s21, 0
    %p42 = por %p40, %p41
    %p43 = scmp.ne.s32.totalorder %s29, %s30
    %p44 = scmp.eq.s32.totalorder %s22, 1
    %p45 = por %p43, %p44
    %p47 = scmp.ne.s32.totalorder %s30, %s46
    %p48 = scmp.eq.s32.totalorder %s22, 0
    %p49 = por %p47, %p48
    %s50 = ssub.s32 %s16, %s23
    %p51 = scmp.eq.s32.totalorder %s50, 0
    %s53 = sadd.s32 %s52, 1
    %s54 = scalar_select %p51, %s52, %s53
    %p57 = pneg %p51
    %p58 = scmp.eq.s32.totalorder %s16, 1
    %p59 = por %p57, %p58
    %p60 = scmp.ne.s32.totalorder %s52, %s55
    %p61 = scmp.eq.s32.totalorder %s16, 0
    %p62 = por %p60, %p61
    %p63 = scmp.ne.s32.totalorder %s52, %s55
    %p64 = scmp.eq.s32.totalorder %s21, 1
    %p65 = por %p63, %p64
    %p66 = scmp.ne.s32.totalorder %s55, %s56
    %p67 = scmp.eq.s32.totalorder %s21, 0
    %p68 = por %p66, %p67
    %p69 = scmp.ne.s32.totalorder %s55, %s56
    %p70 = scmp.eq.s32.totalorder %s22, 1
    %p71 = por %p69, %p70
    %p73 = scmp.ne.s32.totalorder %s56, %s72
    %p74 = scmp.eq.s32.totalorder %s22, 0
    %p75 = por %p73, %p74
    %s76 = ssub.s32 %s16, %s23
    %p77 = scmp.eq.s32.totalorder %s76, 0
    %s79 = sadd.s32 %s78, 1
    %s80 = scalar_select %p77, %s78, %s79
    %p83 = pneg %p77
    %p84 = scmp.eq.s32.totalorder %s16, 1
    %p85 = por %p83, %p84
    %p86 = scmp.ne.s32.totalorder %s78, %s81
    %p87 = scmp.eq.s32.totalorder %s16, 0
    %p88 = por %p86, %p87
    %p89 = scmp.ne.s32.totalorder %s78, %s81
    %p90 = scmp.eq.s32.totalorder %s21, 1
    %p91 = por %p89, %p90
    %p92 = scmp.ne.s32.totalorder %s81, %s82
    %p93 = scmp.eq.s32.totalorder %s21, 0
    %p94 = por %p92, %p93
    %p95 = scmp.ne.s32.totalorder %s81, %s82
    %p96 = scmp.eq.s32.totalorder %s22, 1
    %p97 = por %p95, %p96
    %p99 = scmp.ne.s32.totalorder %s82, %s98
    %p100 = scmp.eq.s32.totalorder %s22, 0
    %p101 = por %p99, %p100
    %s103 = sadd.s32 %s102, 1
    %p106 = scmp.eq.s32.totalorder %s16, 1
    %p107 = scmp.ne.s32.totalorder %s102, %s104
    %p108 = scmp.eq.s32.totalorder %s16, 0
    %p109 = por %p107, %p108
    %p110 = scmp.ne.s32.totalorder %s102, %s104
    %p111 = scmp.eq.s32.totalorder %s21, 1
    %p112 = por %p110, %p111
    %p113 = scmp.ne.s32.totalorder %s104, %s105
    %p114 = scmp.eq.s32.totalorder %s21, 0
    %p115 = por %p113, %p114
    %p116 = scmp.ne.s32.totalorder %s104, %s105
    %p117 = scmp.eq.s32.totalorder %s22, 1
    %p118 = por %p116, %p117
    %p120 = scmp.ne.s32.totalorder %s105, %s119
    %p121 = scmp.eq.s32.totalorder %s22, 0
    %p122 = por %p120, %p121
    %s124 = sadd.s32 %s123, 1
    %p127 = scmp.eq.s32.totalorder %s16, 1
    %p128 = scmp.ne.s32.totalorder %s123, %s125
    %p129 = scmp.eq.s32.totalorder %s16, 0
    %p130 = por %p128, %p129
    %p131 = scmp.ne.s32.totalorder %s123, %s125
    %p132 = scmp.eq.s32.totalorder %s21, 1
    %p133 = por %p131, %p132
    %p134 = scmp.ne.s32.totalorder %s125, %s126
    %p135 = scmp.eq.s32.totalorder %s21, 0
    %p136 = por %p134, %p135
    %p137 = scmp.ne.s32.totalorder %s125, %s126
    %p138 = scmp.eq.s32.totalorder %s22, 1
    %p139 = por %p137, %p138
    %p141 = scmp.ne.s32.totalorder %s126, %s140
    %p142 = scmp.eq.s32.totalorder %s22, 0
    %p143 = por %p141, %p142
    %s145 = sadd.s32 %s144, 1
    %p148 = scmp.eq.s32.totalorder %s16, 1
    %p149 = scmp.ne.s32.totalorder %s144, %s146
    %p150 = scmp.eq.s32.totalorder %s16, 0
    %p151 = por %p149, %p150
    %p152 = scmp.ne.s32.totalorder %s144, %s146
    %p153 = scmp.eq.s32.totalorder %s21, 1
    %p154 = por %p152, %p153
    %p155 = scmp.ne.s32.totalorder %s146, %s147
    %p156 = scmp.eq.s32.totalorder %s21, 0
    %p157 = por %p155, %p156
    %p158 = scmp.ne.s32.totalorder %s146, %s147
    %p159 = scmp.eq.s32.totalorder %s22, 1
    %p160 = por %p158, %p159
    %p162 = scmp.ne.s32.totalorder %s147, %s161
    %p163 = scmp.eq.s32.totalorder %s22, 0
    %p164 = por %p162, %p163
    %s166 = sadd.s32 %s165, 1
    %p169 = scmp.eq.s32.totalorder %s16, 1
    %p170 = scmp.ne.s32.totalorder %s165, %s167
    %p171 = scmp.eq.s32.totalorder %s16, 0
    %p172 = por %p170, %p171
    %p173 = scmp.ne.s32.totalorder %s165, %s167
    %p174 = scmp.eq.s32.totalorder %s21, 1
    %p175 = por %p173, %p174
    %p176 = scmp.ne.s32.totalorder %s167, %s168
    %p177 = scmp.eq.s32.totalorder %s21, 0
    %p178 = por %p176, %p177
    %p179 = scmp.ne.s32.totalorder %s167, %s168
    %p180 = scmp.eq.s32.totalorder %s22, 1
    %p181 = por %p179, %p180
    %p183 = scmp.ne.s32.totalorder %s168, %s182
    %p184 = scmp.eq.s32.totalorder %s22, 0
    %p185 = por %p183, %p184
    %s187 = sadd.s32 %s186, 1
    %p190 = scmp.eq.s32.totalorder %s16, 1
    %p191 = scmp.ne.s32.totalorder %s186, %s188
    %p192 = scmp.eq.s32.totalorder %s16, 0
    %p193 = por %p191, %p192
    %p194 = scmp.ne.s32.totalorder %s186, %s188
    %p195 = scmp.eq.s32.totalorder %s21, 1
    %p196 = por %p194, %p195
    %p197 = scmp.ne.s32.totalorder %s188, %s189
    %p198 = scmp.eq.s32.totalorder %s21, 0
    %p199 = por %p197, %p198
    %p200 = scmp.ne.s32.totalorder %s188, %s189
    %p201 = scmp.eq.s32.totalorder %s22, 1
    %p202 = por %p200, %p201
    %p204 = scmp.ne.s32.totalorder %s189, %s203
    %p205 = scmp.eq.s32.totalorder %s22, 0
    %p206 = por %p204, %p205
    %s208 = sadd.s32 %s207, 1
    %p211 = scmp.eq.s32.totalorder %s16, 1
    %p212 = scmp.ne.s32.totalorder %s207, %s209
    %p213 = scmp.eq.s32.totalorder %s16, 0
    %p214 = por %p212, %p213
    %p215 = scmp.ne.s32.totalorder %s207, %s209
    %p216 = scmp.eq.s32.totalorder %s21, 1
    %p217 = por %p215, %p216
    %p218 = scmp.ne.s32.totalorder %s209, %s210
    %p219 = scmp.eq.s32.totalorder %s21, 0
    %p220 = por %p218, %p219
    %p221 = scmp.ne.s32.totalorder %s209, %s210
    %p222 = scmp.eq.s32.totalorder %s22, 1
    %p223 = por %p221, %p222
    %p225 = scmp.ne.s32.totalorder %s210, %s224
    %p226 = scmp.eq.s32.totalorder %s22, 0
    %p227 = por %p225, %p226
    %s229 = sadd.s32 %s228, 1
    %p232 = scmp.eq.s32.totalorder %s16, 1
    %p233 = scmp.ne.s32.totalorder %s228, %s230
    %p234 = scmp.eq.s32.totalorder %s16, 0
    %p235 = por %p233, %p234
    %p236 = scmp.ne.s32.totalorder %s228, %s230
    %p237 = scmp.eq.s32.totalorder %s21, 1
    %p238 = por %p236, %p237
    %p239 = scmp.ne.s32.totalorder %s230, %s231
    %p240 = scmp.eq.s32.totalorder %s21, 0
    %p241 = por %p239, %p240
    %p242 = scmp.ne.s32.totalorder %s230, %s231
    %p243 = scmp.eq.s32.totalorder %s22, 1
    %p244 = por %p242, %p243
    %p246 = scmp.ne.s32.totalorder %s231, %s245
    %p247 = scmp.eq.s32.totalorder %s22, 0
    %p248 = por %p246, %p247
    %s249 = ssub.s32 %s16, %s23
    %p250 = scmp.eq.s32.totalorder %s249, 0
    %s252 = sadd.s32 %s251, 1
    %s253 = scalar_select %p250, %s251, %s252
    %p256 = pneg %p250
    %p257 = scmp.eq.s32.totalorder %s16, 1
    %p258 = por %p256, %p257
    %p259 = scmp.ne.s32.totalorder %s251, %s254
    %p260 = scmp.eq.s32.totalorder %s16, 0
    %p261 = por %p259, %p260
    %p262 = scmp.ne.s32.totalorder %s251, %s254
    %p263 = scmp.eq.s32.totalorder %s21, 1
    %p264 = por %p262, %p263
    %p265 = scmp.ne.s32.totalorder %s254, %s255
    %p266 = scmp.eq.s32.totalorder %s21, 0
    %p267 = por %p265, %p266
    %p268 = scmp.ne.s32.totalorder %s254, %s255
    %p269 = scmp.eq.s32.totalorder %s22, 1
    %p270 = por %p268, %p269
    %p272 = scmp.ne.s32.totalorder %s255, %s271
    %p273 = scmp.eq.s32.totalorder %s22, 0
    %p274 = por %p272, %p273
    %p275 = scmp.le.s32.totalorder 1, %s16
    %p276 = scmp.lt.s32.totalorder %s16, 3
    %p277 = pnand %p275, %p276
    %p278 = pneg %p277
    // Predicated region
    $region9: #{tree_lstm_forward.1} parent=5 // pred_check
      _
    $region10: #{tree_lstm_forward.1} parent=5 // pred_check_branch
      %280 = sbr.rel (%p277) target = $region12
    $region11: #{tree_lstm_forward.1} parent=5 // pred_region
      %s281 = ssub.s32 %s16, 1
      // Predicated region
      $region13: #{tree_lstm_forward.1} parent=11 // pred_check
        %p282 = pneg %p115
      $region14: #{tree_lstm_forward.1} parent=11 // pred_check_branch
        %284 = sbr.rel (%p282) target = $region16
      $region15: #{tree_lstm_forward.1} parent=11 // pred_region
        _
      $region16: #{tree_lstm_forward.1} parent=11 // pred_fallthru
        _
      // Predicated region
      $region17: #{tree_lstm_forward.1} parent=11 // pred_check
        %p285 = pneg %p136
      $region18: #{tree_lstm_forward.1} parent=11 // pred_check_branch
        %287 = sbr.rel (%p285) target = $region20
      $region19: #{tree_lstm_forward.1} parent=11 // pred_region
        _
      $region20: #{tree_lstm_forward.1} parent=11 // pred_fallthru
        _
      // Predicated region
      $region21: #{tree_lstm_forward.1} parent=11 // pred_check
        %p288 = pneg %p157
      $region22: #{tree_lstm_forward.1} parent=11 // pred_check_branch
        %290 = sbr.rel (%p288) target = $region24
      $region23: #{tree_lstm_forward.1} parent=11 // pred_region
        _
      $region24: #{tree_lstm_forward.1} parent=11 // pred_fallthru
        _
      // Predicated region
      $region25: #{tree_lstm_forward.1} parent=11 // pred_check
        %p291 = pneg %p178
      $region26: #{tree_lstm_forward.1} parent=11 // pred_check_branch
        %293 = sbr.rel (%p291) target = $region28
      $region27: #{tree_lstm_forward.1} parent=11 // pred_region
        _
      $region28: #{tree_lstm_forward.1} parent=11 // pred_fallthru
        _
      // Predicated region
      $region29: #{tree_lstm_forward.1} parent=11 // pred_check
        %p294 = pneg %p199
      $region30: #{tree_lstm_forward.1} parent=11 // pred_check_branch
        %296 = sbr.rel (%p294) target = $region32
      $region31: #{tree_lstm_forward.1} parent=11 // pred_region
        _
      $region32: #{tree_lstm_forward.1} parent=11 // pred_fallthru
        _
      // Predicated region
      $region33: #{tree_lstm_forward.1} parent=11 // pred_check
        %p297 = pneg %p220
      $region34: #{tree_lstm_forward.1} parent=11 // pred_check_branch
        %299 = sbr.rel (%p297) target = $region36
      $region35: #{tree_lstm_forward.1} parent=11 // pred_region
        _
      $region36: #{tree_lstm_forward.1} parent=11 // pred_fallthru
        _
      // Predicated region
      $region37: #{tree_lstm_forward.1} parent=11 // pred_check
        %p300 = pneg %p241
      $region38: #{tree_lstm_forward.1} parent=11 // pred_check_branch
        %302 = sbr.rel (%p300) target = $region40
      $region39: #{tree_lstm_forward.1} parent=11 // pred_region
        _
      $region40: #{tree_lstm_forward.1} parent=11 // pred_fallthru
        _
    $region12: #{tree_lstm_forward.1} parent=5 // pred_fallthru
      _
    %p303 = scmp.lt.s32.totalorder %s16, 2
    // Predicated region
    $region41: #{tree_lstm_forward.1} parent=5 // pred_check
      %p304 = pneg %p303
    $region42: #{tree_lstm_forward.1} parent=5 // pred_check_branch
      %306 = sbr.rel (%p304) target = $region44
    $region43: #{tree_lstm_forward.1} parent=5 // pred_region
      // Predicated region
      $region45: #{tree_lstm_forward.1} parent=43 // pred_check
        %p307 = pneg %p36
      $region46: #{tree_lstm_forward.1} parent=43 // pred_check_branch
        %309 = sbr.rel (%p307) target = $region48
      $region47: #{tree_lstm_forward.1} parent=43 // pred_region
        %s310 = smul.u32 8, %s16
        %p311 = scmp.lt.s32.totalorder %s310, 15
        %s312 = scalar_select %p311, %s310, 15
        %s313 = smul.addr %s312, 4
        %s314 = scalar_lea.vmem %s0, %s313
        %s315 = smul.u32 8, %s16
      $region48: #{tree_lstm_forward.1} parent=43 // pred_fallthru
        _
      // Predicated region
      $region49: #{tree_lstm_forward.1} parent=43 // pred_check
        %p316 = pneg %p62
      $region50: #{tree_lstm_forward.1} parent=43 // pred_check_branch
        %318 = sbr.rel (%p316) target = $region52
      $region51: #{tree_lstm_forward.1} parent=43 // pred_region
        %s319 = smul.u32 8, %s16
        %p320 = scmp.lt.s32.totalorder %s319, 15
        %s321 = scalar_select %p320, %s319, 15
        %s322 = smul.addr %s321, 8
        %s323 = scalar_lea.vmem %s1, %s322
        %s324 = smul.u32 8, %s16
      $region52: #{tree_lstm_forward.1} parent=43 // pred_fallthru
        _
      // Predicated region
      $region53: #{tree_lstm_forward.1} parent=43 // pred_check
        %p325 = pneg %p88
      $region54: #{tree_lstm_forward.1} parent=43 // pred_check_branch
        %327 = sbr.rel (%p325) target = $region56
      $region55: #{tree_lstm_forward.1} parent=43 // pred_region
        %s328 = smul.u32 8, %s16
        %p329 = scmp.lt.s32.totalorder %s328, 15
        %s330 = scalar_select %p329, %s328, 15
        %s331 = smul.addr %s330, 8
        %s332 = scalar_lea.vmem %s2, %s331
        %s333 = smul.u32 8, %s16
      $region56: #{tree_lstm_forward.1} parent=43 // pred_fallthru
        _
    $region44: #{tree_lstm_forward.1} parent=5 // pred_fallthru
      _
    %p334 = scmp.le.s32.totalorder 1, %s16
    %p335 = scmp.lt.s32.totalorder %s16, 3
    %p336 = pnand %p334, %p335
    %p337 = pneg %p336
    // Predicated region
    $region57: #{tree_lstm_forward.1} parent=5 // pred_check
      _
    $region58: #{tree_lstm_forward.1} parent=5 // pred_check_branch
      %339 = sbr.rel (%p336) target = $region60
    $region59: #{tree_lstm_forward.1} parent=5 // pred_region
      %s340 = ssub.s32 %s16, 1
      %s341 = smul.u32 8, %s21
      %p342 = scmp.lt.s32.totalorder %s341, 15
      %s343 = scalar_select %p342, %s341, 15
      %s344 = smul.addr %s343, 4
      %s345 = scalar_lea.vmem %s0, %s344
      %p346 = pneg %p42
      %p347 = pneg %p39
      %s348 = smul.u32 8, %s21
      %p349 = scmp.lt.s32.totalorder %s348, 15
      %s350 = scalar_select %p349, %s348, 15
      %s351 = smul.addr %s350, 8
      %s352 = scalar_lea.vmem %s1, %s351
      %p353 = pneg %p68
      %p354 = pneg %p65
      %s355 = smul.u32 8, %s21
      %p356 = scmp.lt.s32.totalorder %s355, 15
      %s357 = scalar_select %p356, %s355, 15
      %s358 = smul.addr %s357, 8
      %s359 = scalar_lea.vmem %s2, %s358
      %p360 = pneg %p94
      %p361 = pneg %p91
      %p362 = pneg %p115
      %p363 = pneg %p112
      %p364 = pneg %p136
      %p365 = pneg %p133
      %p366 = pneg %p157
      %p367 = pneg %p154
      %p368 = pneg %p178
      %p369 = pneg %p175
      %p370 = pneg %p199
      %p371 = pneg %p196
      %p372 = pneg %p220
      %p373 = pneg %p217
      %p374 = pneg %p241
      %p375 = pneg %p238
      %p376 = pneg %p267
      %p377 = pneg %p264
      %s378 = smul.u32 15, %s21
      %p379 = scmp.lt.s32.totalorder %s378, 29
      %s380 = scalar_select %p379, %s378, 29
      %s381 = smul.addr %s380, 8
      %s382 = scalar_lea.vmem %s10, %s381
      %s383 = smul.u32 8, %s21
      %p384 = scmp.lt.s32.totalorder %s383, 15
      %s385 = scalar_select %p384, %s383, 15
      %s386 = smul.addr %s385, 4
      %s387 = scalar_lea.vmem %s0, %s386
      %s388 = smul.u32 8, %s21
      %s389 = smul.u32 8, %s21
      %p390 = scmp.lt.s32.totalorder %s389, 15
      %s391 = scalar_select %p390, %s389, 15
      %s392 = smul.addr %s391, 8
      %s393 = scalar_lea.vmem %s1, %s392
      %s394 = smul.u32 8, %s21
      %s395 = smul.u32 8, %s21
      %p396 = scmp.lt.s32.totalorder %s395, 15
      %s397 = scalar_select %p396, %s395, 15
      %s398 = smul.addr %s397, 8
      %s399 = scalar_lea.vmem %s2, %s398
      %s400 = smul.u32 8, %s21
      %s401 = smul.u32 15, %s21
      %p402 = scmp.lt.s32.totalorder %s401, 29
      %s403 = scalar_select %p402, %s401, 29
      %s404 = smul.addr %s403, 8
      %s405 = scalar_lea.vmem %s10, %s404
      %s406 = smul.u32 15, %s21
      %v408 = vld [vmem:[%s3] sm:$0xf]
      %v409 = vld [vmem:[%s3 + $0x4] sm:$0xf]
      %v410 = vld [vmem:[%s3 + $0x8] sm:$0xf]
      %v411 = vld [vmem:[%s3 + $0xc] sm:$0xf]
      %v412 = vld [vmem:[%s4] sm:$0xf]
      %v413 = vld [vmem:[%s4 + $0x4] sm:$0xf]
      %v414 = vld [vmem:[%s4 + $0x8] sm:$0xf]
      %v415 = vld [vmem:[%s4 + $0xc] sm:$0xf]
      %v416 = vld [vmem:[%s4 + $0x10] sm:$0xf]
      %v417 = vld [vmem:[%s4 + $0x14] sm:$0xf]
      %v418 = vld [vmem:[%s4 + $0x18] sm:$0xf]
      %v419 = vld [vmem:[%s4 + $0x1c] sm:$0xf]
      %v420 = vld [vmem:[%s6] sm:$0xf]
      %v421 = vld [vmem:[%s6 + $0x4] sm:$0xf]
      %v422 = vld [vmem:[%s6 + $0x8] sm:$0xf]
      %v423 = vld [vmem:[%s6 + $0xc] sm:$0xf]
      %v424 = vld [vmem:[%s6 + $0x10] sm:$0xf]
      %v425 = vld [vmem:[%s6 + $0x14] sm:$0xf]
      %v426 = vld [vmem:[%s6 + $0x18] sm:$0xf]
      %v427 = vld [vmem:[%s6 + $0x1c] sm:$0xf]
      %v428 = vld [vmem:[%s8] sm:$0xf]
      %v429 = vld [vmem:[%s8 + $0x4] sm:$0xf]
      %v430 = vld [vmem:[%s8 + $0x8] sm:$0xf]
      %v431 = vld [vmem:[%s8 + $0xc] sm:$0xf]
      %v432 = vld [vmem:[%s5] sm:$0x1]
      %v433 = vld [vmem:[%s7] sm:$0x1]
      %v434 = vld [vmem:[%s9] sm:$0x1]
      %v435 = vld [vmem:[%s387] sm:$0xf]
      %v436 = vld [vmem:[%s387 + $0x4] sm:$0xf]
      %v437 = vld [vmem:[%s387 + $0x8] sm:$0xf]
      %v438 = vld [vmem:[%s387 + $0xc] sm:$0xf]
      %v439 = vld [vmem:[%s387 + $0x10] sm:$0xf]
      %v440 = vld [vmem:[%s387 + $0x14] sm:$0xf]
      %v441 = vld [vmem:[%s387 + $0x18] sm:$0xf]
      %v442 = vld [vmem:[%s387 + $0x1c] sm:$0xf]
      %v451 = vunpack.c.l.b16 %v435
      %v452 = vunpack.c.l.b16 %v436
      %v453 = vunpack.c.l.b16 %v437
      %v454 = vunpack.c.l.b16 %v438
      %v455 = vunpack.c.l.b16 %v439
      %v456 = vunpack.c.l.b16 %v440
      %v457 = vunpack.c.l.b16 %v441
      %v458 = vunpack.c.l.b16 %v442
      %v459 = vpack.c.b16 %v452, %v451
      %v460 = vpack.c.b16 %v454, %v453
      %v461 = vpack.c.b16 %v456, %v455
      %v462 = vpack.c.b16 %v458, %v457
      %v467 = vunpack.c.l.b16 %v408
      %v468 = vunpack.c.l.b16 %v409
      %v469 = vunpack.c.l.b16 %v410
      %v470 = vunpack.c.l.b16 %v411
      %v471 = vpack.c.b16 %v468, %v467
      %v472 = vpack.c.b16 %v470, %v469
      %vm475 = vcmask 261120
      %v477 = vsel %vm475, %v459, 0
      %v480 = vsel %vm475, %v460, 0
      %v483 = vsel %vm475, %v461, 0
      %v486 = vsel %vm475, %v462, 0
      %488 = vmatprep.subr.bf16.mxu0 0
      %489 = vmatpush1.bf16.msra.mxu0 %v471
      %490 = vmatprep.subr.bf16.mxu0 0
      %491 = vmatpush1.bf16.msra.mxu0 %v472
      %492 = vmatprep.subr.bf16.mxu0 0
      %493 = vmatpush1.bf16.msra.mxu0 0
      %494 = vmatprep.subr.bf16.mxu0 0
      %495 = vmatpush1.bf16.msra.mxu0 0
      %496 = vmatprep.subr.bf16.mxu0 0
      %497 = vmatpush1.bf16.msra.mxu0 0
      %498 = vmatprep.subr.bf16.mxu0 0
      %499 = vmatpush1.bf16.msra.mxu0 0
      %500 = vmatprep.subr.bf16.mxu0 0
      %501 = vmatpush1.bf16.msra.mxu0 0
      %502 = vmatprep.subr.bf16.mxu0 0
      %503 = vmatpush1.bf16.msra.mxu0 0
      %504 = vmatprep.subr.bf16.mxu0 0
      %505 = vmatpush1.bf16.msra.mxu0 0
      %506 = vmatprep.subr.bf16.mxu0 0
      %507 = vmatpush1.bf16.msra.mxu0 0
      %508 = vmatprep.subr.bf16.mxu0 0
      %509 = vmatpush1.bf16.msra.mxu0 0
      %510 = vmatprep.subr.bf16.mxu0 0
      %511 = vmatpush1.bf16.msra.mxu0 0
      %512 = vmatprep.subr.bf16.mxu0 0
      %513 = vmatpush1.bf16.msra.mxu0 0
      %514 = vmatprep.subr.bf16.mxu0 0
      %515 = vmatpush1.bf16.msra.mxu0 0
      %516 = vmatprep.subr.bf16.mxu0 0
      %517 = vmatpush1.bf16.msra.mxu0 0
      %518 = vmatprep.subr.bf16.mxu0 0
      %519 = vmatpush1.bf16.msra.mxu0 0
      %520 = vmatprep.mubr.bf16.mxu0 0
      %521 = vmatmul.mubr.bf16.gmra.mrb[0].mxu0 %v477
      %v522 = vpop.f32.mrb[0].mxu0
      %v523 = vadd.f32 0.0, %v522
      %v524 = vpop.f32.mrb[0].mxu0
      %v525 = vpop.f32.mrb[0].mxu0
      %v526 = vadd.f32 0.0, %v525
      %v527 = vpop.f32.mrb[0].mxu0
      %528 = vmatprep.mubr.bf16.mxu0 0
      %529 = vmatmul.mubr.bf16.gmra.mrb[0].mxu0 %v480
      %v530 = vpop.f32.mrb[0].mxu0
      %v531 = vadd.f32 0.0, %v530
      %v532 = vpop.f32.mrb[0].mxu0
      %v533 = vpop.f32.mrb[0].mxu0
      %v534 = vadd.f32 0.0, %v533
      %v535 = vpop.f32.mrb[0].mxu0
      %536 = vmatprep.mubr.bf16.mxu0 0
      %537 = vmatmul.mubr.bf16.gmra.mrb[0].mxu0 %v483
      %v538 = vpop.f32.mrb[0].mxu0
      %v539 = vadd.f32 0.0, %v538
      %v540 = vpop.f32.mrb[0].mxu0
      %v541 = vpop.f32.mrb[0].mxu0
      %v542 = vadd.f32 0.0, %v541
      %v543 = vpop.f32.mrb[0].mxu0
      %544 = vmatprep.mubr.bf16.mxu0 0
      %545 = vmatmul.mubr.bf16.gmra.mrb[0].mxu0 %v486
      %v546 = vpop.f32.mrb[0].mxu0
      %v547 = vadd.f32 0.0, %v546
      %v548 = vpop.f32.mrb[0].mxu0
      %v549 = vpop.f32.mrb[0].mxu0
      %v550 = vadd.f32 0.0, %v549
      %v551 = vpop.f32.mrb[0].mxu0
      %552 = vdwg.mxu0
      %v553 = vld [vmem:[%s393] sm:$0xff]
      %v554 = vld [vmem:[%s393 + $0x8] sm:$0xff]
      %v555 = vld [vmem:[%s393 + $0x10] sm:$0xff]
      %v556 = vld [vmem:[%s393 + $0x18] sm:$0xff]
      %v557 = vld [vmem:[%s393 + $0x20] sm:$0xff]
      %v558 = vld [vmem:[%s393 + $0x28] sm:$0xff]
      %v559 = vld [vmem:[%s393 + $0x30] sm:$0xff]
      %v560 = vld [vmem:[%s393 + $0x38] sm:$0xff]
      %562 = vset.pattern.permute.xlu0 0
      %563 = vperm.xlu0 %562, %v553
      %v564 = vpop.permute.xlu0 %563
      %567 = vset.pattern.permute.xlu0 0
      %568 = vperm.xlu0 %567, %v554
      %v569 = vpop.permute.xlu0 %568
      %572 = vset.pattern.permute.xlu0 0
      %573 = vperm.xlu0 %572, %v555
      %v574 = vpop.permute.xlu0 %573
      %577 = vset.pattern.permute.xlu0 0
      %578 = vperm.xlu0 %577, %v556
      %v579 = vpop.permute.xlu0 %578
      %582 = vset.pattern.permute.xlu0 0
      %583 = vperm.xlu0 %582, %v557
      %v584 = vpop.permute.xlu0 %583
      %587 = vset.pattern.permute.xlu0 0
      %588 = vperm.xlu0 %587, %v558
      %v589 = vpop.permute.xlu0 %588
      %592 = vset.pattern.permute.xlu0 0
      %593 = vperm.xlu0 %592, %v559
      %v594 = vpop.permute.xlu0 %593
      %597 = vset.pattern.permute.xlu0 0
      %598 = vperm.xlu0 %597, %v560
      %v599 = vpop.permute.xlu0 %598
      %v601 = vmul.f32 %v523, %v564
      %v602 = vmul.f32 %v526, %v569
      %v603 = vmul.f32 %v531, %v574
      %v604 = vmul.f32 %v534, %v579
      %v605 = vmul.f32 %v539, %v584
      %v606 = vmul.f32 %v542, %v589
      %v607 = vmul.f32 %v547, %v594
      %v608 = vmul.f32 %v550, %v599
      %v610 = vlaneseq
      %v611 = vshrl.u32 %v610, 7
      %v612 = vsub.s32 0, %v611
      %v613 = vrot.slane %v432, %v612
      %v615 = vadd.f32 %v601, %v613
      %v616 = vadd.f32 %v602, %v613
      %v617 = vadd.f32 %v603, %v613
      %v618 = vadd.f32 %v604, %v613
      %v619 = vadd.f32 %v605, %v613
      %v620 = vadd.f32 %v606, %v613
      %v621 = vadd.f32 %v607, %v613
      %v622 = vadd.f32 %v608, %v613
      %v623 = vld [vmem:[%s399] sm:$0xff]
      %v624 = vld [vmem:[%s399 + $0x8] sm:$0xff]
      %v625 = vld [vmem:[%s399 + $0x10] sm:$0xff]
      %v626 = vld [vmem:[%s399 + $0x18] sm:$0xff]
      %v627 = vld [vmem:[%s399 + $0x20] sm:$0xff]
      %v628 = vld [vmem:[%s399 + $0x28] sm:$0xff]
      %v629 = vld [vmem:[%s399 + $0x30] sm:$0xff]
      %v630 = vld [vmem:[%s399 + $0x38] sm:$0xff]
      %v631 = vxor.u32 %v615, 2147483648
      %v632 = vxor.u32 %v616, 2147483648
      %v633 = vxor.u32 %v617, 2147483648
      %v634 = vxor.u32 %v618, 2147483648
      %v635 = vxor.u32 %v619, 2147483648
      %v636 = vxor.u32 %v620, 2147483648
      %v637 = vxor.u32 %v621, 2147483648
      %v638 = vxor.u32 %v622, 2147483648
      %v639 = vmul.f32 %v631, 1.442695
      %v640 = vpow.pop %v639
      %v641 = vmul.f32 %v632, 1.442695
      %v642 = vpow.pop %v641
      %v643 = vmul.f32 %v633, 1.442695
      %v644 = vpow.pop %v643
      %v645 = vmul.f32 %v634, 1.442695
      %v646 = vpow.pop %v645
      %v647 = vmul.f32 %v635, 1.442695
      %v648 = vpow.pop %v647
      %v649 = vmul.f32 %v636, 1.442695
      %v650 = vpow.pop %v649
      %v651 = vmul.f32 %v637, 1.442695
      %v652 = vpow.pop %v651
      %v653 = vmul.f32 %v638, 1.442695
      %v654 = vpow.pop %v653
      %v655 = vadd.f32 %v640, 1.0
      %v656 = vadd.f32 %v642, 1.0
      %v657 = vadd.f32 %v644, 1.0
      %v658 = vadd.f32 %v646, 1.0
      %v659 = vadd.f32 %v648, 1.0
      %v660 = vadd.f32 %v650, 1.0
      %v661 = vadd.f32 %v652, 1.0
      %v662 = vadd.f32 %v654, 1.0
      %v663 = vrcp.pop %v655
      %v664 = vmul.f32 1.0, %v663
      %v665 = vrcp.pop %v656
      %v666 = vmul.f32 1.0, %v665
      %v667 = vrcp.pop %v657
      %v668 = vmul.f32 1.0, %v667
      %v669 = vrcp.pop %v658
      %v670 = vmul.f32 1.0, %v669
      %v671 = vrcp.pop %v659
      %v672 = vmul.f32 1.0, %v671
      %v673 = vrcp.pop %v660
      %v674 = vmul.f32 1.0, %v673
      %v675 = vrcp.pop %v661
      %v676 = vmul.f32 1.0, %v675
      %v677 = vrcp.pop %v662
      %v678 = vmul.f32 1.0, %v677
      %687 = vrot.lane.b32.xlu0 %v664, 64
      %v688 = vpop.permute.xlu0 %687
      %689 = vrot.lane.b32.xlu0 %v666, 64
      %v690 = vpop.permute.xlu0 %689
      %691 = vrot.lane.b32.xlu0 %v668, 64
      %v692 = vpop.permute.xlu0 %691
      %693 = vrot.lane.b32.xlu0 %v670, 64
      %v694 = vpop.permute.xlu0 %693
      %695 = vrot.lane.b32.xlu0 %v672, 64
      %v696 = vpop.permute.xlu0 %695
      %697 = vrot.lane.b32.xlu0 %v674, 64
      %v698 = vpop.permute.xlu0 %697
      %699 = vrot.lane.b32.xlu0 %v676, 64
      %v700 = vpop.permute.xlu0 %699
      %701 = vrot.lane.b32.xlu0 %v678, 64
      %v702 = vpop.permute.xlu0 %701
      %v711 = vmul.f32 %v664, %v688
      %v712 = vmul.f32 %v666, %v690
      %v713 = vmul.f32 %v668, %v692
      %v714 = vmul.f32 %v670, %v694
      %v715 = vmul.f32 %v672, %v696
      %v716 = vmul.f32 %v674, %v698
      %v717 = vmul.f32 %v676, %v700
      %v718 = vmul.f32 %v678, %v702
      %v719 = vadd.f32 %v711, %v623
      %v720 = vadd.f32 %v712, %v624
      %v721 = vadd.f32 %v713, %v625
      %v722 = vadd.f32 %v714, %v626
      %v723 = vadd.f32 %v715, %v627
      %v724 = vadd.f32 %v716, %v628
      %v725 = vadd.f32 %v717, %v629
      %v726 = vadd.f32 %v718, %v630
      %v727 = vtanh.pop %v719
      %v728 = vtanh.pop %v720
      %v729 = vtanh.pop %v721
      %v730 = vtanh.pop %v722
      %v731 = vtanh.pop %v723
      %v732 = vtanh.pop %v724
      %v733 = vtanh.pop %v725
      %v734 = vtanh.pop %v726
      %743 = vrot.lane.b32.xlu0 %v727, 32
      %v744 = vpop.permute.xlu0 %743
      %745 = vrot.lane.b32.xlu0 %v728, 32
      %v746 = vpop.permute.xlu0 %745
      %747 = vrot.lane.b32.xlu0 %v729, 32
      %v748 = vpop.permute.xlu0 %747
      %749 = vrot.lane.b32.xlu0 %v730, 32
      %v750 = vpop.permute.xlu0 %749
      %751 = vrot.lane.b32.xlu0 %v731, 32
      %v752 = vpop.permute.xlu0 %751
      %753 = vrot.lane.b32.xlu0 %v732, 32
      %v754 = vpop.permute.xlu0 %753
      %755 = vrot.lane.b32.xlu0 %v733, 32
      %v756 = vpop.permute.xlu0 %755
      %757 = vrot.lane.b32.xlu0 %v734, 32
      %v758 = vpop.permute.xlu0 %757
      %v767 = vmul.f32 %v664, %v744
      %v768 = vmul.f32 %v666, %v746
      %v769 = vmul.f32 %v668, %v748
      %v770 = vmul.f32 %v670, %v750
      %v771 = vmul.f32 %v672, %v752
      %v772 = vmul.f32 %v674, %v754
      %v773 = vmul.f32 %v676, %v756
      %v774 = vmul.f32 %v678, %v758
      %783 = vrot.lane.b32.xlu0 %v767, 96
      %v784 = vpop.permute.xlu0 %783
      %785 = vrot.lane.b32.xlu0 %v768, 96
      %v786 = vpop.permute.xlu0 %785
      %787 = vrot.lane.b32.xlu0 %v769, 96
      %v788 = vpop.permute.xlu0 %787
      %789 = vrot.lane.b32.xlu0 %v770, 96
      %v790 = vpop.permute.xlu0 %789
      %791 = vrot.lane.b32.xlu0 %v771, 96
      %v792 = vpop.permute.xlu0 %791
      %793 = vrot.lane.b32.xlu0 %v772, 96
      %v794 = vpop.permute.xlu0 %793
      %795 = vrot.lane.b32.xlu0 %v773, 96
      %v796 = vpop.permute.xlu0 %795
      %797 = vrot.lane.b32.xlu0 %v774, 96
      %v798 = vpop.permute.xlu0 %797
      %807 = vst.msk [vmem:[#allocation2 + $0x38] sm:$0xff] %vm475, %v784
      %808 = vst.msk [vmem:[#allocation2 + $0x40] sm:$0xff] %vm475, %v786
      %809 = vst.msk [vmem:[#allocation2 + $0x48] sm:$0xff] %vm475, %v788
      %810 = vst.msk [vmem:[#allocation2 + $0x50] sm:$0xff] %vm475, %v790
      %811 = vst.msk [vmem:[#allocation2 + $0x58] sm:$0xff] %vm475, %v792
      %812 = vst.msk [vmem:[#allocation2 + $0x60] sm:$0xff] %vm475, %v794
      %813 = vst.msk [vmem:[#allocation2 + $0x68] sm:$0xff] %vm475, %v796
      %814 = vst.msk [vmem:[#allocation2 + $0x70] sm:$0xff] %vm475, %v798
      %815 = vst.msk [vmem:[#allocation3 + $0x38] sm:$0xff] %vm475, %v719
      %816 = vst.msk [vmem:[#allocation3 + $0x40] sm:$0xff] %vm475, %v720
      %817 = vst.msk [vmem:[#allocation3 + $0x48] sm:$0xff] %vm475, %v721
      %818 = vst.msk [vmem:[#allocation3 + $0x50] sm:$0xff] %vm475, %v722
      %819 = vst.msk [vmem:[#allocation3 + $0x58] sm:$0xff] %vm475, %v723
      %820 = vst.msk [vmem:[#allocation3 + $0x60] sm:$0xff] %vm475, %v724
      %821 = vst.msk [vmem:[#allocation3 + $0x68] sm:$0xff] %vm475, %v725
      %822 = vst.msk [vmem:[#allocation3 + $0x70] sm:$0xff] %vm475, %v726
      %v823 = vld [vmem:[#allocation2 + $0x38] sm:$0xff]
      %v824 = vld [vmem:[#allocation2 + $0x40] sm:$0xff]
      %v825 = vld [vmem:[#allocation2 + $0x48] sm:$0xff]
      %v826 = vld [vmem:[#allocation2 + $0x50] sm:$0xff]
      %v827 = vpack.c.bf16 %v824, %v823
      %v828 = vpack.c.bf16 %v826, %v825
      %v829 = vld [vmem:[#allocation2 + $0x58] sm:$0xff]
      %v830 = vld [vmem:[#allocation2 + $0x60] sm:$0xff]
      %v831 = vld [vmem:[#allocation2 + $0x68] sm:$0xff]
      %v832 = vld [vmem:[#allocation2 + $0x70] sm:$0xff]
      %v833 = vpack.c.bf16 %v830, %v829
      %v834 = vpack.c.bf16 %v832, %v831
      %v835 = vld [vmem:[#allocation3 + $0x38] sm:$0xff]
      %v836 = vld [vmem:[#allocation3 + $0x40] sm:$0xff]
      %v837 = vld [vmem:[#allocation3 + $0x48] sm:$0xff]
      %v838 = vld [vmem:[#allocation3 + $0x50] sm:$0xff]
      %v839 = vld [vmem:[#allocation3 + $0x58] sm:$0xff]
      %v840 = vld [vmem:[#allocation3 + $0x60] sm:$0xff]
      %v841 = vld [vmem:[#allocation3 + $0x68] sm:$0xff]
      %v842 = vld [vmem:[#allocation3 + $0x70] sm:$0xff]
      %v847 = vunpack.c.l.b16 %v424
      %v848 = vunpack.c.l.b16 %v425
      %v849 = vunpack.c.l.b16 %v426
      %v850 = vunpack.c.l.b16 %v427
      %v851 = vpack.c.b16 %v848, %v847
      %v852 = vpack.c.b16 %v850, %v849
      %v856 = vsel %vm475, %v833, 0
      %v859 = vsel %vm475, %v834, 0
      %861 = vmatprep.subr.bf16.mxu0 0
      %862 = vmatpush1.bf16.msra.mxu0 %v851
      %863 = vmatprep.subr.bf16.mxu0 0
      %864 = vmatpush1.bf16.msra.mxu0 %v852
      %865 = vmatprep.subr.bf16.mxu0 0
      %866 = vmatpush1.bf16.msra.mxu0 0
      %867 = vmatprep.subr.bf16.mxu0 0
      %868 = vmatpush1.bf16.msra.mxu0 0
      %869 = vmatprep.subr.bf16.mxu0 0
      %870 = vmatpush1.bf16.msra.mxu0 0
      %871 = vmatprep.subr.bf16.mxu0 0
      %872 = vmatpush1.bf16.msra.mxu0 0
      %873 = vmatprep.subr.bf16.mxu0 0
      %874 = vmatpush1.bf16.msra.mxu0 0
      %875 = vmatprep.subr.bf16.mxu0 0
      %876 = vmatpush1.bf16.msra.mxu0 0
      %877 = vmatprep.subr.bf16.mxu0 0
      %878 = vmatpush1.bf16.msra.mxu0 0
      %879 = vmatprep.subr.bf16.mxu0 0
      %880 = vmatpush1.bf16.msra.mxu0 0
      %881 = vmatprep.subr.bf16.mxu0 0
      %882 = vmatpush1.bf16.msra.mxu0 0
      %883 = vmatprep.subr.bf16.mxu0 0
      %884 = vmatpush1.bf16.msra.mxu0 0
      %885 = vmatprep.subr.bf16.mxu0 0
      %886 = vmatpush1.bf16.msra.mxu0 0
      %887 = vmatprep.subr.bf16.mxu0 0
      %888 = vmatpush1.bf16.msra.mxu0 0
      %889 = vmatprep.subr.bf16.mxu0 0
      %890 = vmatpush1.bf16.msra.mxu0 0
      %891 = vmatprep.subr.bf16.mxu0 0
      %892 = vmatpush1.bf16.msra.mxu0 0
      %893 = vmatprep.mubr.bf16.mxu0 0
      %894 = vmatmul.mubr.bf16.gmra.mrb[0].mxu0 %v856
      %v895 = vpop.f32.mrb[0].mxu0
      %v896 = vadd.f32 0.0, %v895
      %v897 = vpop.f32.mrb[0].mxu0
      %v898 = vpop.f32.mrb[0].mxu0
      %v899 = vadd.f32 0.0, %v898
      %v900 = vpop.f32.mrb[0].mxu0
      %901 = vmatprep.mubr.bf16.mxu0 0
      %902 = vmatmul.mubr.bf16.gmra.mrb[0].mxu0 %v859
      %v903 = vpop.f32.mrb[0].mxu0
      %v904 = vadd.f32 0.0, %v903
      %v905 = vpop.f32.mrb[0].mxu0
      %v906 = vpop.f32.mrb[0].mxu0
      %v907 = vadd.f32 0.0, %v906
      %v908 = vpop.f32.mrb[0].mxu0
      %909 = vdwg.mxu0
      %v914 = vunpack.c.l.b16 %v420
      %v915 = vunpack.c.l.b16 %v421
      %v916 = vunpack.c.l.b16 %v422
      %v917 = vunpack.c.l.b16 %v423
      %v918 = vpack.c.b16 %v915, %v914
      %v919 = vpack.c.b16 %v917, %v916
      %v923 = vsel %vm475, %v827, 0
      %v926 = vsel %vm475, %v828, 0
      %928 = vmatprep.subr.bf16.mxu0 0
      %929 = vmatpush1.bf16.msra.mxu0 %v918
      %930 = vmatprep.subr.bf16.mxu0 0
      %931 = vmatpush1.bf16.msra.mxu0 %v919
      %932 = vmatprep.subr.bf16.mxu0 0
      %933 = vmatpush1.bf16.msra.mxu0 0
      %934 = vmatprep.subr.bf16.mxu0 0
      %935 = vmatpush1.bf16.msra.mxu0 0
      %936 = vmatprep.subr.bf16.mxu0 0
      %937 = vmatpush1.bf16.msra.mxu0 0
      %938 = vmatprep.subr.bf16.mxu0 0
      %939 = vmatpush1.bf16.msra.mxu0 0
      %940 = vmatprep.subr.bf16.mxu0 0
      %941 = vmatpush1.bf16.msra.mxu0 0
      %942 = vmatprep.subr.bf16.mxu0 0
      %943 = vmatpush1.bf16.msra.mxu0 0
      %944 = vmatprep.subr.bf16.mxu0 0
      %945 = vmatpush1.bf16.msra.mxu0 0
      %946 = vmatprep.subr.bf16.mxu0 0
      %947 = vmatpush1.bf16.msra.mxu0 0
      %948 = vmatprep.subr.bf16.mxu0 0
      %949 = vmatpush1.bf16.msra.mxu0 0
      %950 = vmatprep.subr.bf16.mxu0 0
      %951 = vmatpush1.bf16.msra.mxu0 0
      %952 = vmatprep.subr.bf16.mxu0 0
      %953 = vmatpush1.bf16.msra.mxu0 0
      %954 = vmatprep.subr.bf16.mxu0 0
      %955 = vmatpush1.bf16.msra.mxu0 0
      %956 = vmatprep.subr.bf16.mxu0 0
      %957 = vmatpush1.bf16.msra.mxu0 0
      %958 = vmatprep.subr.bf16.mxu0 0
      %959 = vmatpush1.bf16.msra.mxu0 0
      %960 = vmatprep.mubr.bf16.mxu0 0
      %961 = vmatmul.mubr.bf16.gmra.mrb[0].mxu0 %v923
      %v962 = vpop.f32.mrb[0].mxu0
      %v963 = vadd.f32 %v896, %v962
      %v964 = vpop.f32.mrb[0].mxu0
      %v965 = vpop.f32.mrb[0].mxu0
      %v966 = vadd.f32 %v899, %v965
      %v967 = vpop.f32.mrb[0].mxu0
      %968 = vmatprep.mubr.bf16.mxu0 0
      %969 = vmatmul.mubr.bf16.gmra.mrb[0].mxu0 %v926
      %v970 = vpop.f32.mrb[0].mxu0
      %v971 = vadd.f32 %v904, %v970
      %v972 = vpop.f32.mrb[0].mxu0
      %v973 = vpop.f32.mrb[0].mxu0
      %v974 = vadd.f32 %v907, %v973
      %v975 = vpop.f32.mrb[0].mxu0
      %976 = vdwg.mxu0
      %v978 = vlaneseq
      %v979 = vshrl.u32 %v978, 7
      %v980 = vsub.s32 0, %v979
      %v981 = vrot.slane %v433, %v980
      %v983 = vadd.f32 %v963, %v981
      %v984 = vadd.f32 %v966, %v981
      %v985 = vadd.f32 %v971, %v981
      %v986 = vadd.f32 %v974, %v981
      %v987 = vxor.u32 %v983, 2147483648
      %v988 = vxor.u32 %v984, 2147483648
      %v989 = vxor.u32 %v985, 2147483648
      %v990 = vxor.u32 %v986, 2147483648
      %v991 = vmul.f32 %v987, 1.442695
      %v992 = vpow.pop %v991
      %v993 = vmul.f32 %v988, 1.442695
      %v994 = vpow.pop %v993
      %v995 = vmul.f32 %v989, 1.442695
      %v996 = vpow.pop %v995
      %v997 = vmul.f32 %v990, 1.442695
      %v998 = vpow.pop %v997
      %v999 = vadd.f32 %v992, 1.0
      %v1000 = vadd.f32 %v994, 1.0
      %v1001 = vadd.f32 %v996, 1.0
      %v1002 = vadd.f32 %v998, 1.0
      %v1003 = vrcp.pop %v999
      %v1004 = vmul.f32 1.0, %v1003
      %v1005 = vrcp.pop %v1000
      %v1006 = vmul.f32 1.0, %v1005
      %v1007 = vrcp.pop %v1001
      %v1008 = vmul.f32 1.0, %v1007
      %v1009 = vrcp.pop %v1002
      %v1010 = vmul.f32 1.0, %v1009
      %v1011 = vmul.f32 %v1004, %v835
      %v1012 = vmul.f32 %v1006, %v836
      %v1013 = vmul.f32 %v1008, %v837
      %v1014 = vmul.f32 %v1010, %v838
      %1019 = vrot.lane.b32.xlu0 %v839, 32
      %v1020 = vpop.permute.xlu0 %1019
      %1021 = vrot.lane.b32.xlu0 %v840, 32
      %v1022 = vpop.permute.xlu0 %1021
      %1023 = vrot.lane.b32.xlu0 %v841, 32
      %v1024 = vpop.permute.xlu0 %1023
      %1025 = vrot.lane.b32.xlu0 %v842, 32
      %v1026 = vpop.permute.xlu0 %1025
      %v1031 = vmul.f32 %v1004, %v1020
      %v1032 = vmul.f32 %v1006, %v1022
      %v1033 = vmul.f32 %v1008, %v1024
      %v1034 = vmul.f32 %v1010, %v1026
      %1039 = vrot.lane.b32.xlu0 %v1031, 96
      %v1040 = vpop.permute.xlu0 %1039
      %1041 = vrot.lane.b32.xlu0 %v1032, 96
      %v1042 = vpop.permute.xlu0 %1041
      %1043 = vrot.lane.b32.xlu0 %v1033, 96
      %v1044 = vpop.permute.xlu0 %1043
      %1045 = vrot.lane.b32.xlu0 %v1034, 96
      %v1046 = vpop.permute.xlu0 %1045
      %v1051 = vadd.f32 %v1011, %v1040
      %v1052 = vadd.f32 %v1012, %v1042
      %v1053 = vadd.f32 %v1013, %v1044
      %v1054 = vadd.f32 %v1014, %v1046
      %v1059 = vunpack.c.l.b16 %v416
      %v1060 = vunpack.c.l.b16 %v417
      %v1061 = vunpack.c.l.b16 %v418
      %v1062 = vunpack.c.l.b16 %v419
      %v1063 = vpack.c.b16 %v1060, %v1059
      %v1064 = vpack.c.b16 %v1062, %v1061
      %1067 = vmatprep.subr.bf16.mxu0 0
      %1068 = vmatpush1.bf16.msra.mxu0 %v1063
      %1069 = vmatprep.subr.bf16.mxu0 0
      %1070 = vmatpush1.bf16.msra.mxu0 %v1064
      %1071 = vmatprep.subr.bf16.mxu0 0
      %1072 = vmatpush1.bf16.msra.mxu0 0
      %1073 = vmatprep.subr.bf16.mxu0 0
      %1074 = vmatpush1.bf16.msra.mxu0 0
      %1075 = vmatprep.subr.bf16.mxu0 0
      %1076 = vmatpush1.bf16.msra.mxu0 0
      %1077 = vmatprep.subr.bf16.mxu0 0
      %1078 = vmatpush1.bf16.msra.mxu0 0
      %1079 = vmatprep.subr.bf16.mxu0 0
      %1080 = vmatpush1.bf16.msra.mxu0 0
      %1081 = vmatprep.subr.bf16.mxu0 0
      %1082 = vmatpush1.bf16.msra.mxu0 0
      %1083 = vmatprep.subr.bf16.mxu0 0
      %1084 = vmatpush1.bf16.msra.mxu0 0
      %1085 = vmatprep.subr.bf16.mxu0 0
      %1086 = vmatpush1.bf16.msra.mxu0 0
      %1087 = vmatprep.subr.bf16.mxu0 0
      %1088 = vmatpush1.bf16.msra.mxu0 0
      %1089 = vmatprep.subr.bf16.mxu0 0
      %1090 = vmatpush1.bf16.msra.mxu0 0
      %1091 = vmatprep.subr.bf16.mxu0 0
      %1092 = vmatpush1.bf16.msra.mxu0 0
      %1093 = vmatprep.subr.bf16.mxu0 0
      %1094 = vmatpush1.bf16.msra.mxu0 0
      %1095 = vmatprep.subr.bf16.mxu0 0
      %1096 = vmatpush1.bf16.msra.mxu0 0
      %1097 = vmatprep.subr.bf16.mxu0 0
      %1098 = vmatpush1.bf16.msra.mxu0 0
      %1099 = vmatprep.mubr.bf16.mxu0 0
      %1100 = vmatmul.mubr.bf16.gmra.mrb[0].mxu0 %v856
      %v1101 = vpop.f32.mrb[0].mxu0
      %v1102 = vadd.f32 0.0, %v1101
      %v1103 = vpop.f32.mrb[0].mxu0
      %v1104 = vpop.f32.mrb[0].mxu0
      %v1105 = vadd.f32 0.0, %v1104
      %v1106 = vpop.f32.mrb[0].mxu0
      %1107 = vmatprep.mubr.bf16.mxu0 0
      %1108 = vmatmul.mubr.bf16.gmra.mrb[0].mxu0 %v859
      %v1109 = vpop.f32.mrb[0].mxu0
      %v1110 = vadd.f32 0.0, %v1109
      %v1111 = vpop.f32.mrb[0].mxu0
      %v1112 = vpop.f32.mrb[0].mxu0
      %v1113 = vadd.f32 0.0, %v1112
      %v1114 = vpop.f32.mrb[0].mxu0
      %1115 = vdwg.mxu0
      %v1120 = vunpack.c.l.b16 %v412
      %v1121 = vunpack.c.l.b16 %v413
      %v1122 = vunpack.c.l.b16 %v414
      %v1123 = vunpack.c.l.b16 %v415
      %v1124 = vpack.c.b16 %v1121, %v1120
      %v1125 = vpack.c.b16 %v1123, %v1122
      %1128 = vmatprep.subr.bf16.mxu0 0
      %1129 = vmatpush1.bf16.msra.mxu0 %v1124
      %1130 = vmatprep.subr.bf16.mxu0 0
      %1131 = vmatpush1.bf16.msra.mxu0 %v1125
      %1132 = vmatprep.subr.bf16.mxu0 0
      %1133 = vmatpush1.bf16.msra.mxu0 0
      %1134 = vmatprep.subr.bf16.mxu0 0
      %1135 = vmatpush1.bf16.msra.mxu0 0
      %1136 = vmatprep.subr.bf16.mxu0 0
      %1137 = vmatpush1.bf16.msra.mxu0 0
      %1138 = vmatprep.subr.bf16.mxu0 0
      %1139 = vmatpush1.bf16.msra.mxu0 0
      %1140 = vmatprep.subr.bf16.mxu0 0
      %1141 = vmatpush1.bf16.msra.mxu0 0
      %1142 = vmatprep.subr.bf16.mxu0 0
      %1143 = vmatpush1.bf16.msra.mxu0 0
      %1144 = vmatprep.subr.bf16.mxu0 0
      %1145 = vmatpush1.bf16.msra.mxu0 0
      %1146 = vmatprep.subr.bf16.mxu0 0
      %1147 = vmatpush1.bf16.msra.mxu0 0
      %1148 = vmatprep.subr.bf16.mxu0 0
      %1149 = vmatpush1.bf16.msra.mxu0 0
      %1150 = vmatprep.subr.bf16.mxu0 0
      %1151 = vmatpush1.bf16.msra.mxu0 0
      %1152 = vmatprep.subr.bf16.mxu0 0
      %1153 = vmatpush1.bf16.msra.mxu0 0
      %1154 = vmatprep.subr.bf16.mxu0 0
      %1155 = vmatpush1.bf16.msra.mxu0 0
      %1156 = vmatprep.subr.bf16.mxu0 0
      %1157 = vmatpush1.bf16.msra.mxu0 0
      %1158 = vmatprep.subr.bf16.mxu0 0
      %1159 = vmatpush1.bf16.msra.mxu0 0
      %1160 = vmatprep.mubr.bf16.mxu0 0
      %1161 = vmatmul.mubr.bf16.gmra.mrb[0].mxu0 %v923
      %v1162 = vpop.f32.mrb[0].mxu0
      %v1163 = vadd.f32 %v1102, %v1162
      %v1164 = vpop.f32.mrb[0].mxu0
      %v1165 = vpop.f32.mrb[0].mxu0
      %v1166 = vadd.f32 %v1105, %v1165
      %v1167 = vpop.f32.mrb[0].mxu0
      %1168 = vmatprep.mubr.bf16.mxu0 0
      %1169 = vmatmul.mubr.bf16.gmra.mrb[0].mxu0 %v926
      %v1170 = vpop.f32.mrb[0].mxu0
      %v1171 = vadd.f32 %v1110, %v1170
      %v1172 = vpop.f32.mrb[0].mxu0
      %v1173 = vpop.f32.mrb[0].mxu0
      %v1174 = vadd.f32 %v1113, %v1173
      %v1175 = vpop.f32.mrb[0].mxu0
      %1176 = vdwg.mxu0
      %v1177 = vadd.f32 %v1163, %v613
      %v1178 = vadd.f32 %v1166, %v613
      %v1179 = vadd.f32 %v1171, %v613
      %v1180 = vadd.f32 %v1174, %v613
      %v1181 = vxor.u32 %v1177, 2147483648
      %v1182 = vxor.u32 %v1178, 2147483648
      %v1183 = vxor.u32 %v1179, 2147483648
      %v1184 = vxor.u32 %v1180, 2147483648
      %v1185 = vmul.f32 %v1181, 1.442695
      %v1186 = vpow.pop %v1185
      %v1187 = vmul.f32 %v1182, 1.442695
      %v1188 = vpow.pop %v1187
      %v1189 = vmul.f32 %v1183, 1.442695
      %v1190 = vpow.pop %v1189
      %v1191 = vmul.f32 %v1184, 1.442695
      %v1192 = vpow.pop %v1191
      %v1193 = vadd.f32 %v1186, 1.0
      %v1194 = vadd.f32 %v1188, 1.0
      %v1195 = vadd.f32 %v1190, 1.0
      %v1196 = vadd.f32 %v1192, 1.0
      %v1197 = vrcp.pop %v1193
      %v1198 = vmul.f32 1.0, %v1197
      %v1199 = vrcp.pop %v1194
      %v1200 = vmul.f32 1.0, %v1199
      %v1201 = vrcp.pop %v1195
      %v1202 = vmul.f32 1.0, %v1201
      %v1203 = vrcp.pop %v1196
      %v1204 = vmul.f32 1.0, %v1203
      %1209 = vrot.lane.b32.xlu0 %v1198, 64
      %v1210 = vpop.permute.xlu0 %1209
      %1211 = vrot.lane.b32.xlu0 %v1200, 64
      %v1212 = vpop.permute.xlu0 %1211
      %1213 = vrot.lane.b32.xlu0 %v1202, 64
      %v1214 = vpop.permute.xlu0 %1213
      %1215 = vrot.lane.b32.xlu0 %v1204, 64
      %v1216 = vpop.permute.xlu0 %1215
      %v1221 = vmul.f32 %v1198, %v1210
      %v1222 = vmul.f32 %v1200, %v1212
      %v1223 = vmul.f32 %v1202, %v1214
      %v1224 = vmul.f32 %v1204, %v1216
      %v1225 = vadd.f32 %v1221, %v1051
      %v1226 = vadd.f32 %v1222, %v1052
      %v1227 = vadd.f32 %v1223, %v1053
      %v1228 = vadd.f32 %v1224, %v1054
      %v1229 = vtanh.pop %v1225
      %v1230 = vtanh.pop %v1226
      %v1231 = vtanh.pop %v1227
      %v1232 = vtanh.pop %v1228
      %1237 = vrot.lane.b32.xlu0 %v1229, 32
      %v1238 = vpop.permute.xlu0 %1237
      %1239 = vrot.lane.b32.xlu0 %v1230, 32
      %v1240 = vpop.permute.xlu0 %1239
      %1241 = vrot.lane.b32.xlu0 %v1231, 32
      %v1242 = vpop.permute.xlu0 %1241
      %1243 = vrot.lane.b32.xlu0 %v1232, 32
      %v1244 = vpop.permute.xlu0 %1243
      %v1249 = vmul.f32 %v1198, %v1238
      %v1250 = vmul.f32 %v1200, %v1240
      %v1251 = vmul.f32 %v1202, %v1242
      %v1252 = vmul.f32 %v1204, %v1244
      %1257 = vrot.lane.b32.xlu0 %v1249, 96
      %v1258 = vpop.permute.xlu0 %1257
      %1259 = vrot.lane.b32.xlu0 %v1250, 96
      %v1260 = vpop.permute.xlu0 %1259
      %1261 = vrot.lane.b32.xlu0 %v1251, 96
      %v1262 = vpop.permute.xlu0 %1261
      %1263 = vrot.lane.b32.xlu0 %v1252, 96
      %v1264 = vpop.permute.xlu0 %1263
      %1269 = vst.msk [vmem:[#allocation2 + $0x18] sm:$0xff] %vm475, %v1258
      %1270 = vst.msk [vmem:[#allocation2 + $0x20] sm:$0xff] %vm475, %v1260
      %1271 = vst.msk [vmem:[#allocation2 + $0x28] sm:$0xff] %vm475, %v1262
      %1272 = vst.msk [vmem:[#allocation2 + $0x30] sm:$0xff] %vm475, %v1264
      %1273 = vst.msk [vmem:[#allocation3 + $0x18] sm:$0xff] %vm475, %v1225
      %1274 = vst.msk [vmem:[#allocation3 + $0x20] sm:$0xff] %vm475, %v1226
      %1275 = vst.msk [vmem:[#allocation3 + $0x28] sm:$0xff] %vm475, %v1227
      %1276 = vst.msk [vmem:[#allocation3 + $0x30] sm:$0xff] %vm475, %v1228
      %v1277 = vld [vmem:[#allocation2 + $0x18] sm:$0xff]
      %v1278 = vld [vmem:[#allocation2 + $0x20] sm:$0xff]
      %v1279 = vpack.c.bf16 %v1278, %v1277
      %v1280 = vld [vmem:[#allocation2 + $0x28] sm:$0xff]
      %v1281 = vld [vmem:[#allocation2 + $0x30] sm:$0xff]
      %v1282 = vpack.c.bf16 %v1281, %v1280
      %v1283 = vld [vmem:[#allocation3 + $0x18] sm:$0xff]
      %v1284 = vld [vmem:[#allocation3 + $0x20] sm:$0xff]
      %v1285 = vld [vmem:[#allocation3 + $0x28] sm:$0xff]
      %v1286 = vld [vmem:[#allocation3 + $0x30] sm:$0xff]
      %v1288 = vsel %vm475, %v1282, 0
      %1290 = vmatprep.subr.bf16.mxu0 0
      %1291 = vmatpush1.bf16.msra.mxu0 %v851
      %1292 = vmatprep.subr.bf16.mxu0 0
      %1293 = vmatpush1.bf16.msra.mxu0 %v852
      %1294 = vmatprep.subr.bf16.mxu0 0
      %1295 = vmatpush1.bf16.msra.mxu0 0
      %1296 = vmatprep.subr.bf16.mxu0 0
      %1297 = vmatpush1.bf16.msra.mxu0 0
      %1298 = vmatprep.subr.bf16.mxu0 0
      %1299 = vmatpush1.bf16.msra.mxu0 0
      %1300 = vmatprep.subr.bf16.mxu0 0
      %1301 = vmatpush1.bf16.msra.mxu0 0
      %1302 = vmatprep.subr.bf16.mxu0 0
      %1303 = vmatpush1.bf16.msra.mxu0 0
      %1304 = vmatprep.subr.bf16.mxu0 0
      %1305 = vmatpush1.bf16.msra.mxu0 0
      %1306 = vmatprep.subr.bf16.mxu0 0
      %1307 = vmatpush1.bf16.msra.mxu0 0
      %1308 = vmatprep.subr.bf16.mxu0 0
      %1309 = vmatpush1.bf16.msra.mxu0 0
      %1310 = vmatprep.subr.bf16.mxu0 0
      %1311 = vmatpush1.bf16.msra.mxu0 0
      %1312 = vmatprep.subr.bf16.mxu0 0
      %1313 = vmatpush1.bf16.msra.mxu0 0
      %1314 = vmatprep.subr.bf16.mxu0 0
      %1315 = vmatpush1.bf16.msra.mxu0 0
      %1316 = vmatprep.subr.bf16.mxu0 0
      %1317 = vmatpush1.bf16.msra.mxu0 0
      %1318 = vmatprep.subr.bf16.mxu0 0
      %1319 = vmatpush1.bf16.msra.mxu0 0
      %1320 = vmatprep.subr.bf16.mxu0 0
      %1321 = vmatpush1.bf16.msra.mxu0 0
      %1322 = vmatprep.mubr.bf16.mxu0 0
      %1323 = vmatmul.mubr.bf16.gmra.mrb[0].mxu0 %v1288
      %v1324 = vpop.f32.mrb[0].mxu0
      %v1325 = vadd.f32 0.0, %v1324
      %v1326 = vpop.f32.mrb[0].mxu0
      %v1327 = vpop.f32.mrb[0].mxu0
      %v1328 = vadd.f32 0.0, %v1327
      %v1329 = vpop.f32.mrb[0].mxu0
      %1330 = vdwg.mxu0
      %v1332 = vsel %vm475, %v1279, 0
      %1334 = vmatprep.subr.bf16.mxu0 0
      %1335 = vmatpush1.bf16.msra.mxu0 %v918
      %1336 = vmatprep.subr.bf16.mxu0 0
      %1337 = vmatpush1.bf16.msra.mxu0 %v919
      %1338 = vmatprep.subr.bf16.mxu0 0
      %1339 = vmatpush1.bf16.msra.mxu0 0
      %1340 = vmatprep.subr.bf16.mxu0 0
      %1341 = vmatpush1.bf16.msra.mxu0 0
      %1342 = vmatprep.subr.bf16.mxu0 0
      %1343 = vmatpush1.bf16.msra.mxu0 0
      %1344 = vmatprep.subr.bf16.mxu0 0
      %1345 = vmatpush1.bf16.msra.mxu0 0
      %1346 = vmatprep.subr.bf16.mxu0 0
      %1347 = vmatpush1.bf16.msra.mxu0 0
      %1348 = vmatprep.subr.bf16.mxu0 0
      %1349 = vmatpush1.bf16.msra.mxu0 0
      %1350 = vmatprep.subr.bf16.mxu0 0
      %1351 = vmatpush1.bf16.msra.mxu0 0
      %1352 = vmatprep.subr.bf16.mxu0 0
      %1353 = vmatpush1.bf16.msra.mxu0 0
      %1354 = vmatprep.subr.bf16.mxu0 0
      %1355 = vmatpush1.bf16.msra.mxu0 0
      %1356 = vmatprep.subr.bf16.mxu0 0
      %1357 = vmatpush1.bf16.msra.mxu0 0
      %1358 = vmatprep.subr.bf16.mxu0 0
      %1359 = vmatpush1.bf16.msra.mxu0 0
      %1360 = vmatprep.subr.bf16.mxu0 0
      %1361 = vmatpush1.bf16.msra.mxu0 0
      %1362 = vmatprep.subr.bf16.mxu0 0
      %1363 = vmatpush1.bf16.msra.mxu0 0
      %1364 = vmatprep.subr.bf16.mxu0 0
      %1365 = vmatpush1.bf16.msra.mxu0 0
      %1366 = vmatprep.mubr.bf16.mxu0 0
      %1367 = vmatmul.mubr.bf16.gmra.mrb[0].mxu0 %v1332
      %v1368 = vpop.f32.mrb[0].mxu0
      %v1369 = vadd.f32 %v1325, %v1368
      %v1370 = vpop.f32.mrb[0].mxu0
      %v1371 = vpop.f32.mrb[0].mxu0
      %v1372 = vadd.f32 %v1328, %v1371
      %v1373 = vpop.f32.mrb[0].mxu0
      %1374 = vdwg.mxu0
      %v1375 = vadd.f32 %v1369, %v981
      %v1376 = vadd.f32 %v1372, %v981
      %v1377 = vxor.u32 %v1375, 2147483648
      %v1378 = vxor.u32 %v1376, 2147483648
      %v1379 = vmul.f32 %v1377, 1.442695
      %v1380 = vpow.pop %v1379
      %v1381 = vmul.f32 %v1378, 1.442695
      %v1382 = vpow.pop %v1381
      %v1383 = vadd.f32 %v1380, 1.0
      %v1384 = vadd.f32 %v1382, 1.0
      %v1385 = vrcp.pop %v1383
      %v1386 = vmul.f32 1.0, %v1385
      %v1387 = vrcp.pop %v1384
      %v1388 = vmul.f32 1.0, %v1387
      %v1389 = vmul.f32 %v1386, %v1283
      %v1390 = vmul.f32 %v1388, %v1284
      %1393 = vrot.lane.b32.xlu0 %v1285, 32
      %v1394 = vpop.permute.xlu0 %1393
      %1395 = vrot.lane.b32.xlu0 %v1286, 32
      %v1396 = vpop.permute.xlu0 %1395
      %v1399 = vmul.f32 %v1386, %v1394
      %v1400 = vmul.f32 %v1388, %v1396
      %1403 = vrot.lane.b32.xlu0 %v1399, 96
      %v1404 = vpop.permute.xlu0 %1403
      %1405 = vrot.lane.b32.xlu0 %v1400, 96
      %v1406 = vpop.permute.xlu0 %1405
      %v1409 = vadd.f32 %v1389, %v1404
      %v1410 = vadd.f32 %v1390, %v1406
      %1411 = vmatprep.subr.bf16.mxu0 0
      %1412 = vmatpush1.bf16.msra.mxu0 %v1063
      %1413 = vmatprep.subr.bf16.mxu0 0
      %1414 = vmatpush1.bf16.msra.mxu0 %v1064
      %1415 = vmatprep.subr.bf16.mxu0 0
      %1416 = vmatpush1.bf16.msra.mxu0 0
      %1417 = vmatprep.subr.bf16.mxu0 0
      %1418 = vmatpush1.bf16.msra.mxu0 0
      %1419 = vmatprep.subr.bf16.mxu0 0
      %1420 = vmatpush1.bf16.msra.mxu0 0
      %1421 = vmatprep.subr.bf16.mxu0 0
      %1422 = vmatpush1.bf16.msra.mxu0 0
      %1423 = vmatprep.subr.bf16.mxu0 0
      %1424 = vmatpush1.bf16.msra.mxu0 0
      %1425 = vmatprep.subr.bf16.mxu0 0
      %1426 = vmatpush1.bf16.msra.mxu0 0
      %1427 = vmatprep.subr.bf16.mxu0 0
      %1428 = vmatpush1.bf16.msra.mxu0 0
      %1429 = vmatprep.subr.bf16.mxu0 0
      %1430 = vmatpush1.bf16.msra.mxu0 0
      %1431 = vmatprep.subr.bf16.mxu0 0
      %1432 = vmatpush1.bf16.msra.mxu0 0
      %1433 = vmatprep.subr.bf16.mxu0 0
      %1434 = vmatpush1.bf16.msra.mxu0 0
      %1435 = vmatprep.subr.bf16.mxu0 0
      %1436 = vmatpush1.bf16.msra.mxu0 0
      %1437 = vmatprep.subr.bf16.mxu0 0
      %1438 = vmatpush1.bf16.msra.mxu0 0
      %1439 = vmatprep.subr.bf16.mxu0 0
      %1440 = vmatpush1.bf16.msra.mxu0 0
      %1441 = vmatprep.subr.bf16.mxu0 0
      %1442 = vmatpush1.bf16.msra.mxu0 0
      %1443 = vmatprep.mubr.bf16.mxu0 0
      %1444 = vmatmul.mubr.bf16.gmra.mrb[0].mxu0 %v1288
      %v1445 = vpop.f32.mrb[0].mxu0
      %v1446 = vadd.f32 0.0, %v1445
      %v1447 = vpop.f32.mrb[0].mxu0
      %v1448 = vpop.f32.mrb[0].mxu0
      %v1449 = vadd.f32 0.0, %v1448
      %v1450 = vpop.f32.mrb[0].mxu0
      %1451 = vdwg.mxu0
      %1452 = vmatprep.subr.bf16.mxu0 0
      %1453 = vmatpush1.bf16.msra.mxu0 %v1124
      %1454 = vmatprep.subr.bf16.mxu0 0
      %1455 = vmatpush1.bf16.msra.mxu0 %v1125
      %1456 = vmatprep.subr.bf16.mxu0 0
      %1457 = vmatpush1.bf16.msra.mxu0 0
      %1458 = vmatprep.subr.bf16.mxu0 0
      %1459 = vmatpush1.bf16.msra.mxu0 0
      %1460 = vmatprep.subr.bf16.mxu0 0
      %1461 = vmatpush1.bf16.msra.mxu0 0
      %1462 = vmatprep.subr.bf16.mxu0 0
      %1463 = vmatpush1.bf16.msra.mxu0 0
      %1464 = vmatprep.subr.bf16.mxu0 0
      %1465 = vmatpush1.bf16.msra.mxu0 0
      %1466 = vmatprep.subr.bf16.mxu0 0
      %1467 = vmatpush1.bf16.msra.mxu0 0
      %1468 = vmatprep.subr.bf16.mxu0 0
      %1469 = vmatpush1.bf16.msra.mxu0 0
      %1470 = vmatprep.subr.bf16.mxu0 0
      %1471 = vmatpush1.bf16.msra.mxu0 0
      %1472 = vmatprep.subr.bf16.mxu0 0
      %1473 = vmatpush1.bf16.msra.mxu0 0
      %1474 = vmatprep.subr.bf16.mxu0 0
      %1475 = vmatpush1.bf16.msra.mxu0 0
      %1476 = vmatprep.subr.bf16.mxu0 0
      %1477 = vmatpush1.bf16.msra.mxu0 0
      %1478 = vmatprep.subr.bf16.mxu0 0
      %1479 = vmatpush1.bf16.msra.mxu0 0
      %1480 = vmatprep.subr.bf16.mxu0 0
      %1481 = vmatpush1.bf16.msra.mxu0 0
      %1482 = vmatprep.subr.bf16.mxu0 0
      %1483 = vmatpush1.bf16.msra.mxu0 0
      %1484 = vmatprep.mubr.bf16.mxu0 0
      %1485 = vmatmul.mubr.bf16.gmra.mrb[0].mxu0 %v1332
      %v1486 = vpop.f32.mrb[0].mxu0
      %v1487 = vadd.f32 %v1446, %v1486
      %v1488 = vpop.f32.mrb[0].mxu0
      %v1489 = vpop.f32.mrb[0].mxu0
      %v1490 = vadd.f32 %v1449, %v1489
      %v1491 = vpop.f32.mrb[0].mxu0
      %1492 = vdwg.mxu0
      %v1493 = vadd.f32 %v1487, %v613
      %v1494 = vadd.f32 %v1490, %v613
      %v1495 = vxor.u32 %v1493, 2147483648
      %v1496 = vxor.u32 %v1494, 2147483648
      %v1497 = vmul.f32 %v1495, 1.442695
      %v1498 = vpow.pop %v1497
      %v1499 = vmul.f32 %v1496, 1.442695
      %v1500 = vpow.pop %v1499
      %v1501 = vadd.f32 %v1498, 1.0
      %v1502 = vadd.f32 %v1500, 1.0
      %v1503 = vrcp.pop %v1501
      %v1504 = vmul.f32 1.0, %v1503
      %v1505 = vrcp.pop %v1502
      %v1506 = vmul.f32 1.0, %v1505
      %1509 = vrot.lane.b32.xlu0 %v1504, 64
      %v1510 = vpop.permute.xlu0 %1509
      %1511 = vrot.lane.b32.xlu0 %v1506, 64
      %v1512 = vpop.permute.xlu0 %1511
      %v1515 = vmul.f32 %v1504, %v1510
      %v1516 = vmul.f32 %v1506, %v1512
      %v1517 = vadd.f32 %v1515, %v1409
      %v1518 = vadd.f32 %v1516, %v1410
      %v1519 = vtanh.pop %v1517
      %v1520 = vtanh.pop %v1518
      %1523 = vrot.lane.b32.xlu0 %v1519, 32
      %v1524 = vpop.permute.xlu0 %1523
      %1525 = vrot.lane.b32.xlu0 %v1520, 32
      %v1526 = vpop.permute.xlu0 %1525
      %v1529 = vmul.f32 %v1504, %v1524
      %v1530 = vmul.f32 %v1506, %v1526
      %1533 = vrot.lane.b32.xlu0 %v1529, 96
      %v1534 = vpop.permute.xlu0 %1533
      %1535 = vrot.lane.b32.xlu0 %v1530, 96
      %v1536 = vpop.permute.xlu0 %1535
      %1539 = vst.msk [vmem:[#allocation2 + $0x8] sm:$0xff] %vm475, %v1534
      %1540 = vst.msk [vmem:[#allocation2 + $0x10] sm:$0xff] %vm475, %v1536
      %1541 = vst.msk [vmem:[#allocation3 + $0x8] sm:$0xff] %vm475, %v1517
      %1542 = vst.msk [vmem:[#allocation3 + $0x10] sm:$0xff] %vm475, %v1518
      %v1543 = vld [vmem:[#allocation2 + $0x8] sm:$0xff]
      %v1544 = vpack.c.bf16 %v1543, %v1543
      %v1545 = vld [vmem:[#allocation2 + $0x10] sm:$0xff]
      %v1546 = vpack.c.bf16 %v1545, %v1545
      %v1547 = vld [vmem:[#allocation3 + $0x8] sm:$0xff]
      %v1548 = vld [vmem:[#allocation3 + $0x10] sm:$0xff]
      %v1550 = vsel %vm475, %v1546, 0
      %1552 = vmatprep.subr.bf16.mxu0 0
      %1553 = vmatpush1.bf16.msra.mxu0 %v851
      %1554 = vmatprep.subr.bf16.mxu0 0
      %1555 = vmatpush1.bf16.msra.mxu0 %v852
      %1556 = vmatprep.subr.bf16.mxu0 0
      %1557 = vmatpush1.bf16.msra.mxu0 0
      %1558 = vmatprep.subr.bf16.mxu0 0
      %1559 = vmatpush1.bf16.msra.mxu0 0
      %1560 = vmatprep.subr.bf16.mxu0 0
      %1561 = vmatpush1.bf16.msra.mxu0 0
      %1562 = vmatprep.subr.bf16.mxu0 0
      %1563 = vmatpush1.bf16.msra.mxu0 0
      %1564 = vmatprep.subr.bf16.mxu0 0
      %1565 = vmatpush1.bf16.msra.mxu0 0
      %1566 = vmatprep.subr.bf16.mxu0 0
      %1567 = vmatpush1.bf16.msra.mxu0 0
      %1568 = vmatprep.subr.bf16.mxu0 0
      %1569 = vmatpush1.bf16.msra.mxu0 0
      %1570 = vmatprep.subr.bf16.mxu0 0
      %1571 = vmatpush1.bf16.msra.mxu0 0
      %1572 = vmatprep.subr.bf16.mxu0 0
      %1573 = vmatpush1.bf16.msra.mxu0 0
      %1574 = vmatprep.subr.bf16.mxu0 0
      %1575 = vmatpush1.bf16.msra.mxu0 0
      %1576 = vmatprep.subr.bf16.mxu0 0
      %1577 = vmatpush1.bf16.msra.mxu0 0
      %1578 = vmatprep.subr.bf16.mxu0 0
      %1579 = vmatpush1.bf16.msra.mxu0 0
      %1580 = vmatprep.subr.bf16.mxu0 0
      %1581 = vmatpush1.bf16.msra.mxu0 0
      %1582 = vmatprep.subr.bf16.mxu0 0
      %1583 = vmatpush1.bf16.msra.mxu0 0
      %1584 = vmatprep.mubr.bf16.mxu0 0
      %1585 = vmatmul.mubr.bf16.gmra.mrb[0].mxu0 %v1550
      %v1586 = vpop.f32.mrb[0].mxu0
      %v1587 = vadd.f32 0.0, %v1586
      %v1588 = vpop.f32.mrb[0].mxu0
      %v1589 = vpop.f32.mrb[0].mxu0
      %v1590 = vpop.f32.mrb[0].mxu0
      %1591 = vdwg.mxu0
      %v1593 = vsel %vm475, %v1544, 0
      %1595 = vmatprep.subr.bf16.mxu0 0
      %1596 = vmatpush1.bf16.msra.mxu0 %v918
      %1597 = vmatprep.subr.bf16.mxu0 0
      %1598 = vmatpush1.bf16.msra.mxu0 %v919
      %1599 = vmatprep.subr.bf16.mxu0 0
      %1600 = vmatpush1.bf16.msra.mxu0 0
      %1601 = vmatprep.subr.bf16.mxu0 0
      %1602 = vmatpush1.bf16.msra.mxu0 0
      %1603 = vmatprep.subr.bf16.mxu0 0
      %1604 = vmatpush1.bf16.msra.mxu0 0
      %1605 = vmatprep.subr.bf16.mxu0 0
      %1606 = vmatpush1.bf16.msra.mxu0 0
      %1607 = vmatprep.subr.bf16.mxu0 0
      %1608 = vmatpush1.bf16.msra.mxu0 0
      %1609 = vmatprep.subr.bf16.mxu0 0
      %1610 = vmatpush1.bf16.msra.mxu0 0
      %1611 = vmatprep.subr.bf16.mxu0 0
      %1612 = vmatpush1.bf16.msra.mxu0 0
      %1613 = vmatprep.subr.bf16.mxu0 0
      %1614 = vmatpush1.bf16.msra.mxu0 0
      %1615 = vmatprep.subr.bf16.mxu0 0
      %1616 = vmatpush1.bf16.msra.mxu0 0
      %1617 = vmatprep.subr.bf16.mxu0 0
      %1618 = vmatpush1.bf16.msra.mxu0 0
      %1619 = vmatprep.subr.bf16.mxu0 0
      %1620 = vmatpush1.bf16.msra.mxu0 0
      %1621 = vmatprep.subr.bf16.mxu0 0
      %1622 = vmatpush1.bf16.msra.mxu0 0
      %1623 = vmatprep.subr.bf16.mxu0 0
      %1624 = vmatpush1.bf16.msra.mxu0 0
      %1625 = vmatprep.subr.bf16.mxu0 0
      %1626 = vmatpush1.bf16.msra.mxu0 0
      %1627 = vmatprep.mubr.bf16.mxu0 0
      %1628 = vmatmul.mubr.bf16.gmra.mrb[0].mxu0 %v1593
      %v1629 = vpop.f32.mrb[0].mxu0
      %v1630 = vadd.f32 %v1587, %v1629
      %v1631 = vpop.f32.mrb[0].mxu0
      %v1632 = vpop.f32.mrb[0].mxu0
      %v1633 = vpop.f32.mrb[0].mxu0
      %1634 = vdwg.mxu0
      %v1635 = vadd.f32 %v1630, %v981
      %v1636 = vxor.u32 %v1635, 2147483648
      %v1637 = vmul.f32 %v1636, 1.442695
      %v1638 = vpow.pop %v1637
      %v1639 = vadd.f32 %v1638, 1.0
      %v1640 = vrcp.pop %v1639
      %v1641 = vmul.f32 1.0, %v1640
      %v1642 = vmul.f32 %v1641, %v1547
      %1644 = vrot.lane.b32.xlu0 %v1548, 32
      %v1645 = vpop.permute.xlu0 %1644
      %v1647 = vmul.f32 %v1641, %v1645
      %1649 = vrot.lane.b32.xlu0 %v1647, 96
      %v1650 = vpop.permute.xlu0 %1649
      %v1652 = vadd.f32 %v1642, %v1650
      %1653 = vmatprep.subr.bf16.mxu0 0
      %1654 = vmatpush1.bf16.msra.mxu0 %v1063
      %1655 = vmatprep.subr.bf16.mxu0 0
      %1656 = vmatpush1.bf16.msra.mxu0 %v1064
      %1657 = vmatprep.subr.bf16.mxu0 0
      %1658 = vmatpush1.bf16.msra.mxu0 0
      %1659 = vmatprep.subr.bf16.mxu0 0
      %1660 = vmatpush1.bf16.msra.mxu0 0
      %1661 = vmatprep.subr.bf16.mxu0 0
      %1662 = vmatpush1.bf16.msra.mxu0 0
      %1663 = vmatprep.subr.bf16.mxu0 0
      %1664 = vmatpush1.bf16.msra.mxu0 0
      %1665 = vmatprep.subr.bf16.mxu0 0
      %1666 = vmatpush1.bf16.msra.mxu0 0
      %1667 = vmatprep.subr.bf16.mxu0 0
      %1668 = vmatpush1.bf16.msra.mxu0 0
      %1669 = vmatprep.subr.bf16.mxu0 0
      %1670 = vmatpush1.bf16.msra.mxu0 0
      %1671 = vmatprep.subr.bf16.mxu0 0
      %1672 = vmatpush1.bf16.msra.mxu0 0
      %1673 = vmatprep.subr.bf16.mxu0 0
      %1674 = vmatpush1.bf16.msra.mxu0 0
      %1675 = vmatprep.subr.bf16.mxu0 0
      %1676 = vmatpush1.bf16.msra.mxu0 0
      %1677 = vmatprep.subr.bf16.mxu0 0
      %1678 = vmatpush1.bf16.msra.mxu0 0
      %1679 = vmatprep.subr.bf16.mxu0 0
      %1680 = vmatpush1.bf16.msra.mxu0 0
      %1681 = vmatprep.subr.bf16.mxu0 0
      %1682 = vmatpush1.bf16.msra.mxu0 0
      %1683 = vmatprep.subr.bf16.mxu0 0
      %1684 = vmatpush1.bf16.msra.mxu0 0
      %1685 = vmatprep.mubr.bf16.mxu0 0
      %1686 = vmatmul.mubr.bf16.gmra.mrb[0].mxu0 %v1550
      %v1687 = vpop.f32.mrb[0].mxu0
      %v1688 = vadd.f32 0.0, %v1687
      %v1689 = vpop.f32.mrb[0].mxu0
      %v1690 = vpop.f32.mrb[0].mxu0
      %v1691 = vpop.f32.mrb[0].mxu0
      %1692 = vdwg.mxu0
      %1693 = vmatprep.subr.bf16.mxu0 0
      %1694 = vmatpush1.bf16.msra.mxu0 %v1124
      %1695 = vmatprep.subr.bf16.mxu0 0
      %1696 = vmatpush1.bf16.msra.mxu0 %v1125
      %1697 = vmatprep.subr.bf16.mxu0 0
      %1698 = vmatpush1.bf16.msra.mxu0 0
      %1699 = vmatprep.subr.bf16.mxu0 0
      %1700 = vmatpush1.bf16.msra.mxu0 0
      %1701 = vmatprep.subr.bf16.mxu0 0
      %1702 = vmatpush1.bf16.msra.mxu0 0
      %1703 = vmatprep.subr.bf16.mxu0 0
      %1704 = vmatpush1.bf16.msra.mxu0 0
      %1705 = vmatprep.subr.bf16.mxu0 0
      %1706 = vmatpush1.bf16.msra.mxu0 0
      %1707 = vmatprep.subr.bf16.mxu0 0
      %1708 = vmatpush1.bf16.msra.mxu0 0
      %1709 = vmatprep.subr.bf16.mxu0 0
      %1710 = vmatpush1.bf16.msra.mxu0 0
      %1711 = vmatprep.subr.bf16.mxu0 0
      %1712 = vmatpush1.bf16.msra.mxu0 0
      %1713 = vmatprep.subr.bf16.mxu0 0
      %1714 = vmatpush1.bf16.msra.mxu0 0
      %1715 = vmatprep.subr.bf16.mxu0 0
      %1716 = vmatpush1.bf16.msra.mxu0 0
      %1717 = vmatprep.subr.bf16.mxu0 0
      %1718 = vmatpush1.bf16.msra.mxu0 0
      %1719 = vmatprep.subr.bf16.mxu0 0
      %1720 = vmatpush1.bf16.msra.mxu0 0
      %1721 = vmatprep.subr.bf16.mxu0 0
      %1722 = vmatpush1.bf16.msra.mxu0 0
      %1723 = vmatprep.subr.bf16.mxu0 0
      %1724 = vmatpush1.bf16.msra.mxu0 0
      %1725 = vmatprep.mubr.bf16.mxu0 0
      %1726 = vmatmul.mubr.bf16.gmra.mrb[0].mxu0 %v1593
      %v1727 = vpop.f32.mrb[0].mxu0
      %v1728 = vadd.f32 %v1688, %v1727
      %v1729 = vpop.f32.mrb[0].mxu0
      %v1730 = vpop.f32.mrb[0].mxu0
      %v1731 = vpop.f32.mrb[0].mxu0
      %1732 = vdwg.mxu0
      %v1733 = vadd.f32 %v1728, %v613
      %v1734 = vxor.u32 %v1733, 2147483648
      %v1735 = vmul.f32 %v1734, 1.442695
      %v1736 = vpow.pop %v1735
      %v1737 = vadd.f32 %v1736, 1.0
      %v1738 = vrcp.pop %v1737
      %v1739 = vmul.f32 1.0, %v1738
      %1741 = vrot.lane.b32.xlu0 %v1739, 64
      %v1742 = vpop.permute.xlu0 %1741
      %v1744 = vmul.f32 %v1739, %v1742
      %v1745 = vadd.f32 %v1744, %v1652
      %v1746 = vtanh.pop %v1745
      %1748 = vrot.lane.b32.xlu0 %v1746, 32
      %v1749 = vpop.permute.xlu0 %1748
      %v1751 = vmul.f32 %v1739, %v1749
      %1753 = vrot.lane.b32.xlu0 %v1751, 96
      %v1754 = vpop.permute.xlu0 %1753
      %1756 = vst.msk [vmem:[#allocation2] sm:$0xff] %vm475, %v1754
      %1757 = vst.msk [vmem:[#allocation3] sm:$0xff] %vm475, %v1745
      %v1758 = vld [vmem:[#allocation2] sm:$0xff]
      %v1759 = vld [vmem:[#allocation2 + $0x8] sm:$0xff]
      %v1760 = vld [vmem:[#allocation2 + $0x10] sm:$0xff]
      %v1761 = vld [vmem:[#allocation2 + $0x18] sm:$0xff]
      %v1762 = vld [vmem:[#allocation2 + $0x20] sm:$0xff]
      %v1763 = vld [vmem:[#allocation2 + $0x28] sm:$0xff]
      %v1764 = vld [vmem:[#allocation2 + $0x30] sm:$0xff]
      %v1765 = vld [vmem:[#allocation2 + $0x38] sm:$0xff]
      %v1766 = vld [vmem:[#allocation2 + $0x40] sm:$0xff]
      %v1767 = vld [vmem:[#allocation2 + $0x48] sm:$0xff]
      %v1768 = vld [vmem:[#allocation2 + $0x50] sm:$0xff]
      %v1769 = vld [vmem:[#allocation2 + $0x58] sm:$0xff]
      %v1770 = vld [vmem:[#allocation2 + $0x60] sm:$0xff]
      %v1771 = vld [vmem:[#allocation2 + $0x68] sm:$0xff]
      %v1772 = vld [vmem:[#allocation2 + $0x70] sm:$0xff]
      %v1773 = vpack.c.bf16 %v1759, %v1758
      %v1774 = vpack.c.bf16 %v1761, %v1760
      %v1775 = vpack.c.bf16 %v1763, %v1762
      %v1776 = vpack.c.bf16 %v1765, %v1764
      %v1777 = vpack.c.bf16 %v1767, %v1766
      %v1778 = vpack.c.bf16 %v1769, %v1768
      %v1779 = vpack.c.bf16 %v1771, %v1770
      %v1780 = vpack.c.bf16 %v1772, %v1772
      %v1782 = vlaneseq
      %v1783 = vshrl.u32 %v1782, 7
      %v1784 = vsub.s32 0, %v1783
      %v1785 = vrot.slane %v434, %v1784
      %v1791 = vunpack.c.l.b16 %v428
      %v1792 = vunpack.c.l.b16 %v429
      %v1793 = vunpack.c.l.b16 %v430
      %v1794 = vunpack.c.l.b16 %v431
      %v1795 = vpack.c.b16 %v1792, %v1791
      %v1796 = vpack.c.b16 %v1794, %v1793
      %v1800 = vsel %vm475, %v1773, 0
      %v1803 = vsel %vm475, %v1774, 0
      %v1806 = vsel %vm475, %v1775, 0
      %v1809 = vsel %vm475, %v1776, 0
      %v1812 = vsel %vm475, %v1777, 0
      %v1815 = vsel %vm475, %v1778, 0
      %v1818 = vsel %vm475, %v1779, 0
      %v1821 = vsel %vm475, %v1780, 0
      %1823 = vmatprep.subr.bf16.mxu0 0
      %1824 = vmatpush1.bf16.msra.mxu0 %v1795
      %1825 = vmatprep.subr.bf16.mxu0 0
      %1826 = vmatpush1.bf16.msra.mxu0 %v1796
      %1827 = vmatprep.subr.bf16.mxu0 0
      %1828 = vmatpush1.bf16.msra.mxu0 0
      %1829 = vmatprep.subr.bf16.mxu0 0
      %1830 = vmatpush1.bf16.msra.mxu0 0
      %1831 = vmatprep.subr.bf16.mxu0 0
      %1832 = vmatpush1.bf16.msra.mxu0 0
      %1833 = vmatprep.subr.bf16.mxu0 0
      %1834 = vmatpush1.bf16.msra.mxu0 0
      %1835 = vmatprep.subr.bf16.mxu0 0
      %1836 = vmatpush1.bf16.msra.mxu0 0
      %1837 = vmatprep.subr.bf16.mxu0 0
      %1838 = vmatpush1.bf16.msra.mxu0 0
      %1839 = vmatprep.subr.bf16.mxu0 0
      %1840 = vmatpush1.bf16.msra.mxu0 0
      %1841 = vmatprep.subr.bf16.mxu0 0
      %1842 = vmatpush1.bf16.msra.mxu0 0
      %1843 = vmatprep.subr.bf16.mxu0 0
      %1844 = vmatpush1.bf16.msra.mxu0 0
      %1845 = vmatprep.subr.bf16.mxu0 0
      %1846 = vmatpush1.bf16.msra.mxu0 0
      %1847 = vmatprep.subr.bf16.mxu0 0
      %1848 = vmatpush1.bf16.msra.mxu0 0
      %1849 = vmatprep.subr.bf16.mxu0 0
      %1850 = vmatpush1.bf16.msra.mxu0 0
      %1851 = vmatprep.subr.bf16.mxu0 0
      %1852 = vmatpush1.bf16.msra.mxu0 0
      %1853 = vmatprep.subr.bf16.mxu0 0
      %1854 = vmatpush1.bf16.msra.mxu0 0
      %1855 = vmatprep.mubr.bf16.mxu0 0
      %1856 = vmatmul.mubr.bf16.gmra.mrb[0].mxu0 %v1800
      %v1857 = vpop.f32.mrb[0].mxu0
      %v1858 = vadd.f32 %v1785, %v1857
      %v1859 = vpop.f32.mrb[0].mxu0
      %v1860 = vpop.f32.mrb[0].mxu0
      %v1861 = vadd.f32 %v1785, %v1860
      %v1862 = vpop.f32.mrb[0].mxu0
      %1863 = vmatprep.mubr.bf16.mxu0 0
      %1864 = vmatmul.mubr.bf16.gmra.mrb[0].mxu0 %v1803
      %v1865 = vpop.f32.mrb[0].mxu0
      %v1866 = vadd.f32 %v1785, %v1865
      %v1867 = vpop.f32.mrb[0].mxu0
      %v1868 = vpop.f32.mrb[0].mxu0
      %v1869 = vadd.f32 %v1785, %v1868
      %v1870 = vpop.f32.mrb[0].mxu0
      %1871 = vmatprep.mubr.bf16.mxu0 0
      %1872 = vmatmul.mubr.bf16.gmra.mrb[0].mxu0 %v1806
      %v1873 = vpop.f32.mrb[0].mxu0
      %v1874 = vadd.f32 %v1785, %v1873
      %v1875 = vpop.f32.mrb[0].mxu0
      %v1876 = vpop.f32.mrb[0].mxu0
      %v1877 = vadd.f32 %v1785, %v1876
      %v1878 = vpop.f32.mrb[0].mxu0
      %1879 = vmatprep.mubr.bf16.mxu0 0
      %1880 = vmatmul.mubr.bf16.gmra.mrb[0].mxu0 %v1809
      %v1881 = vpop.f32.mrb[0].mxu0
      %v1882 = vadd.f32 %v1785, %v1881
      %v1883 = vpop.f32.mrb[0].mxu0
      %v1884 = vpop.f32.mrb[0].mxu0
      %v1885 = vadd.f32 %v1785, %v1884
      %v1886 = vpop.f32.mrb[0].mxu0
      %1887 = vmatprep.mubr.bf16.mxu0 0
      %1888 = vmatmul.mubr.bf16.gmra.mrb[0].mxu0 %v1812
      %v1889 = vpop.f32.mrb[0].mxu0
      %v1890 = vadd.f32 %v1785, %v1889
      %v1891 = vpop.f32.mrb[0].mxu0
      %v1892 = vpop.f32.mrb[0].mxu0
      %v1893 = vadd.f32 %v1785, %v1892
      %v1894 = vpop.f32.mrb[0].mxu0
      %1895 = vmatprep.mubr.bf16.mxu0 0
      %1896 = vmatmul.mubr.bf16.gmra.mrb[0].mxu0 %v1815
      %v1897 = vpop.f32.mrb[0].mxu0
      %v1898 = vadd.f32 %v1785, %v1897
      %v1899 = vpop.f32.mrb[0].mxu0
      %v1900 = vpop.f32.mrb[0].mxu0
      %v1901 = vadd.f32 %v1785, %v1900
      %v1902 = vpop.f32.mrb[0].mxu0
      %1903 = vmatprep.mubr.bf16.mxu0 0
      %1904 = vmatmul.mubr.bf16.gmra.mrb[0].mxu0 %v1818
      %v1905 = vpop.f32.mrb[0].mxu0
      %v1906 = vadd.f32 %v1785, %v1905
      %v1907 = vpop.f32.mrb[0].mxu0
      %v1908 = vpop.f32.mrb[0].mxu0
      %v1909 = vadd.f32 %v1785, %v1908
      %v1910 = vpop.f32.mrb[0].mxu0
      %1911 = vmatprep.mubr.bf16.mxu0 0
      %1912 = vmatmul.mubr.bf16.gmra.mrb[0].mxu0 %v1821
      %v1913 = vpop.f32.mrb[0].mxu0
      %v1914 = vadd.f32 %v1785, %v1913
      %v1915 = vpop.f32.mrb[0].mxu0
      %v1916 = vpop.f32.mrb[0].mxu0
      %v1917 = vpop.f32.mrb[0].mxu0
      %1918 = vdwg.mxu0
      %vm1919 = vcmask 39936
      %1920 = vst.msk [vmem:[%s405] sm:$0xff] %vm1919, %v1858
      %1921 = vst.msk [vmem:[%s405 + $0x8] sm:$0xff] %vm1919, %v1861
      %1922 = vst.msk [vmem:[%s405 + $0x10] sm:$0xff] %vm1919, %v1866
      %1923 = vst.msk [vmem:[%s405 + $0x18] sm:$0xff] %vm1919, %v1869
      %1924 = vst.msk [vmem:[%s405 + $0x20] sm:$0xff] %vm1919, %v1874
      %1925 = vst.msk [vmem:[%s405 + $0x28] sm:$0xff] %vm1919, %v1877
      %1926 = vst.msk [vmem:[%s405 + $0x30] sm:$0xff] %vm1919, %v1882
      %1927 = vst.msk [vmem:[%s405 + $0x38] sm:$0xff] %vm1919, %v1885
      %1928 = vst.msk [vmem:[%s405 + $0x40] sm:$0xff] %vm1919, %v1890
      %1929 = vst.msk [vmem:[%s405 + $0x48] sm:$0xff] %vm1919, %v1893
      %1930 = vst.msk [vmem:[%s405 + $0x50] sm:$0xff] %vm1919, %v1898
      %1931 = vst.msk [vmem:[%s405 + $0x58] sm:$0xff] %vm1919, %v1901
      %1932 = vst.msk [vmem:[%s405 + $0x60] sm:$0xff] %vm1919, %v1906
      %1933 = vst.msk [vmem:[%s405 + $0x68] sm:$0xff] %vm1919, %v1909
      %1934 = vst.msk [vmem:[%s405 + $0x70] sm:$0xff] %vm1919, %v1914
      %s1935 = smul.u32 15, %s21
      %p1936 = scmp.lt.s32.totalorder %s1935, 29
      %s1937 = scalar_select %p1936, %s1935, 29
      %s1938 = smul.addr %s1937, 8
      %s1939 = scalar_lea.vmem %s10, %s1938
      // Predicated region
      $region61: #{tree_lstm_forward.1} parent=59 // pred_check
        %p1940 = pneg %p264
      $region62: #{tree_lstm_forward.1} parent=59 // pred_check_branch
        %1942 = sbr.rel (%p1940) target = $region64
      $region63: #{tree_lstm_forward.1} parent=59 // pred_region
        %s1943 = smul.u32 15, %s21
      $region64: #{tree_lstm_forward.1} parent=59 // pred_fallthru
        _
    $region60: #{tree_lstm_forward.1} parent=5 // pred_fallthru
      _
    %p1944 = scmp.le.s32.totalorder 2, %s16
    // Predicated region
    $region65: #{tree_lstm_forward.1} parent=5 // pred_check
      %p1945 = pneg %p1944
    $region66: #{tree_lstm_forward.1} parent=5 // pred_check_branch
      %1947 = sbr.rel (%p1945) target = $region68
    $region67: #{tree_lstm_forward.1} parent=5 // pred_region
      %s1948 = ssub.s32 %s16, 2
      // Predicated region
      $region69: #{tree_lstm_forward.1} parent=67 // pred_check
        %p1949 = pneg %p270
      $region70: #{tree_lstm_forward.1} parent=67 // pred_check_branch
        %1951 = sbr.rel (%p1949) target = $region72
      $region71: #{tree_lstm_forward.1} parent=67 // pred_region
        %s1952 = smul.u32 15, %s22
        %p1953 = scmp.lt.s32.totalorder %s1952, 29
        %s1954 = scalar_select %p1953, %s1952, 29
        %s1955 = smul.addr %s1954, 8
        %s1956 = scalar_lea.vmem %s10, %s1955
      $region72: #{tree_lstm_forward.1} parent=67 // pred_fallthru
        _
    $region68: #{tree_lstm_forward.1} parent=5 // pred_fallthru
      _
  $region6: #{tree_lstm_forward.1} parent=0 // loop_footer
    %s20 = sadd.s32 1, %s16
  $region7: #{tree_lstm_forward.1} parent=0 // loop_footer_branch
    %15 = sbr.rel target = $region3
  $region8: #{tree_lstm_forward.1} parent=0 // loop_exit
    _

</llo_original>
